<compile_context>
chip_gen: v7x
topology: tpu7x:2x2x1
jax: 0.10.0
libtpu: 0.0.40
codegen_flags: <defaults>
</compile_context>

<pallas_src>
import functools

import jax
import jax.numpy as jnp
import numpy as np
from jax.experimental import pallas as pl
from jax.experimental.pallas import tpu as pltpu


def _query_attention_kernel(x_ref, mask_ref, w_ref, o_ref, m_ref, *, dims):
    """One batch element per grid step (channels-first, lane-dense).

    x_ref    : (1, C, N)     input slab, N = D*H*W flattened on the lane axis
    mask_ref : (27, N)       per-tap halo masks (1.0 where the neighbour exists)
    w_ref    : (C, K_pad)    [flattened 27*C weights | bias column | zero pad]
    o_ref    : (1, C, N)     sigmoid(conv3d(x) + b)
    m_ref    : (K_pad, N)    VMEM scratch: transposed im2col matrix
    """
    D, H, W = dims
    C = x_ref.shape[1]
    N = x_ref.shape[2]
    K = 27 * C                      # valid im2col rows
    K_pad = m_ref.shape[0]          # padded (multiple of 128) contraction dim

    x = x_ref[0]                    # (C, N) float32

    # ---- build the transposed im2col matrix in VMEM ----------------------
    # Row block [t*C : (t+1)*C] holds x shifted by tap t (kd,kh,kw) with the
    # out-of-bounds halo zeroed via the precomputed mask.  A shift of
    # (sd, sh, sw) in (d, h, w) is a single lane roll of sd*H*W + sh*W + sw.
    t = 0
    for sd in (-1, 0, 1):
        for sh in (-1, 0, 1):
            for sw in (-1, 0, 1):
                off = sd * (H * W) + sh * W + sw
                if off == 0:
                    shifted = x
                else:
                    shifted = pltpu.roll(x, (-off) % N, axis=1)
                if (sd, sh, sw) != (0, 0, 0):
                    shifted = shifted * mask_ref[t:t + 1, :]
                m_ref[t * C:(t + 1) * C, :] = shifted
                t += 1

    # Bias row (constant ones) followed by zero padding up to K_pad.
    m_ref[K:, :] = jnp.zeros((K_pad - K, N), jnp.float32)
    m_ref[K:K + 1, :] = jnp.ones((1, N), jnp.float32)

    # ---- single MXU contraction: (C, K_pad) @ (K_pad, N) -> (C, N) --------
    acc = jnp.dot(w_ref[...], m_ref[...], preferred_element_type=jnp.float32)
    o_ref[0] = jax.nn.sigmoid(acc).astype(o_ref.dtype)


@jax.jit
def query_attention_module(x_ncdhw, weight_oidhw, bias):
    """sigmoid(Conv3d(x, k=3, stride=1, padding=1) + b), PyTorch NCDHW layout.

    x_ncdhw      : (B, C, D, H, W)
    weight_oidhw : (C_out, C_in, 3, 3, 3)   (PyTorch Conv3d weight layout)
    bias         : (C_out,)
    """
    B, C, D, H, W = x_ncdhw.shape
    N = D * H * W
    K = 27 * C
    K_pad = ((K + 1 + 127) // 128) * 128    # weights + bias row, lane aligned

    # Glue (all cheap / trace-time): flatten spatial dims (contiguous reshape,
    # no pad, no layout change), re-layout weights to (C_out, 27*C_in) with the
    # bias folded in as an extra column, and build the 27 halo masks as a
    # compile-time constant.
    x_flat = x_ncdhw.reshape(B, C, N).astype(jnp.float32)

    w2 = jnp.transpose(weight_oidhw, (0, 2, 3, 4, 1)).reshape(C, K)
    w_pad = jnp.concatenate(
        [w2.astype(jnp.float32),
         bias.reshape(C, 1).astype(jnp.float32),
         jnp.zeros((C, K_pad - K - 1), jnp.float32)],
        axis=1)                              # (C, K_pad)

    n_idx = np.arange(N)
    dd = n_idx // (H * W)
    hh = (n_idx // W) % H
    ww = n_idx % W
    mask_rows = []
    for sd in (-1, 0, 1):
        for sh in (-1, 0, 1):
            for sw in (-1, 0, 1):
                ok = ((dd + sd >= 0) & (dd + sd < D) &
                      (hh + sh >= 0) & (hh + sh < H) &
                      (ww + sw >= 0) & (ww + sw < W))
                mask_rows.append(ok)
    masks = jnp.asarray(np.stack(mask_rows).astype(np.float32))   # (27, N)

    out_flat = pl.pallas_call(
        functools.partial(_query_attention_kernel, dims=(D, H, W)),
        out_shape=jax.ShapeDtypeStruct((B, C, N), jnp.float32),
        grid=(B,),
        in_specs=[
            pl.BlockSpec((1, C, N), lambda i: (i, 0, 0)),
            pl.BlockSpec((27, N), lambda i: (0, 0)),
            pl.BlockSpec((C, K_pad), lambda i: (0, 0)),
        ],
        out_specs=pl.BlockSpec((1, C, N), lambda i: (i, 0, 0)),
        scratch_shapes=[pltpu.VMEM((K_pad, N), jnp.float32)],
        compiler_params=pltpu.CompilerParams(
            dimension_semantics=("parallel",)),
    )(x_flat, masks, w_pad)

    return out_flat.reshape(B, C, D, H, W)


if __name__ == "__main__":
    # Small shapes consistent with the module: num_channel=4, 8^3 volume.
    B, C, D, H, W = 2, 4, 8, 8, 8

    key = jax.random.PRNGKey(0)
    kx, kw, kb = jax.random.split(key, 3)

    x = jax.random.normal(kx, (B, C, D, H, W), jnp.float32)
    weight = jax.random.normal(kw, (C, C, 3, 3, 3), jnp.float32) * 0.1
    bias = jax.random.normal(kb, (C,), jnp.float32) * 0.1

    out = query_attention_module(x, weight, bias)
    out = jax.block_until_ready(out)

    # Pure-JAX reference (PyTorch Conv3d == cross-correlation, padding=1).
    ref_conv = jax.lax.conv_general_dilated(
        x, weight, window_strides=(1, 1, 1), padding="SAME",
        dimension_numbers=("NCDHW", "OIDHW", "NCDHW"),
        precision=jax.lax.Precision.HIGHEST)
    ref = jax.nn.sigmoid(ref_conv + bias.reshape(1, C, 1, 1, 1))

    # Tolerance allows for MXU default-precision (bf16-pass) accumulation.
    np.testing.assert_allclose(np.asarray(out), np.asarray(ref),
                               rtol=1e-2, atol=1e-2)
    print("KERNEL_OK")
</pallas_src>

<mosaic_0001>
module attributes {stable_mosaic.version = 11 : i64} {
  func.func @_query_attention_kernel(%arg0: i32, %arg1: memref<1x4x512xf32, #tpu.memory_space<vmem>>, %arg2: memref<27x512xf32, #tpu.memory_space<vmem>>, %arg3: memref<4x128xf32, #tpu.memory_space<vmem>>, %arg4: memref<1x4x512xf32, #tpu.memory_space<vmem>>, %arg5: memref<128x512xf32, #tpu.memory_space<vmem>>) attributes {dimension_semantics = [#tpu.dimension_semantics<parallel>], iteration_bounds = array<i64: 2>, scalar_prefetch = 0 : i64, scratch_operands = 1 : i64, tpu.core_type = #tpu.core_type<tc>, window_params = [{transform_indices = @transform_0, window_bounds = array<i64: 1, 4, 512>}, {pipeline_mode = #tpu.pipeline_mode<synchronous>, transform_indices = @transform_1, window_bounds = array<i64: 27, 512>}, {pipeline_mode = #tpu.pipeline_mode<synchronous>, transform_indices = @transform_2, window_bounds = array<i64: 4, 128>}, {transform_indices = @transform_3, window_bounds = array<i64: 1, 4, 512>}]} {
    %c0 = arith.constant 0 : index
    %c0_0 = arith.constant 0 : index
    %c0_1 = arith.constant 0 : index
    %0 = vector.load %arg1[%c0, %c0_0, %c0_1] : memref<1x4x512xf32, #tpu.memory_space<vmem>>, vector<1x4x512xf32>
    %1 = vector.shape_cast %0 : vector<1x4x512xf32> to vector<4x512xf32>
    %c73_i32 = arith.constant 73 : i32
    %2 = tpu.dynamic_rotate %1 by %c73_i32 dim 1 : vector<4x512xf32>, i32 -> vector<4x512xf32>
    %c0_2 = arith.constant 0 : index
    %c0_3 = arith.constant 0 : index
    %3 = vector.load %arg2[%c0_2, %c0_3] : memref<27x512xf32, #tpu.memory_space<vmem>>, vector<1x512xf32>
    %4 = vector.broadcast %3 : vector<1x512xf32> to vector<4x512xf32>
    %5 = arith.mulf %2, %4 : vector<4x512xf32>
    %c0_4 = arith.constant 0 : index
    %c0_5 = arith.constant 0 : index
    %6 = vector.load %arg5[%c0_4, %c0_5] : memref<128x512xf32, #tpu.memory_space<vmem>>, vector<4x512xf32>
    tpu.vector_store %arg5[%c0_4, %c0_5], %5 {strides = array<i32>} : memref<128x512xf32, #tpu.memory_space<vmem>>, vector<4x512xf32>,
    %c72_i32 = arith.constant 72 : i32
    %7 = tpu.dynamic_rotate %1 by %c72_i32 dim 1 : vector<4x512xf32>, i32 -> vector<4x512xf32>
    %c1 = arith.constant 1 : index
    %c0_6 = arith.constant 0 : index
    %8 = vector.load %arg2[%c1, %c0_6] : memref<27x512xf32, #tpu.memory_space<vmem>>, vector<1x512xf32>
    %9 = vector.broadcast %8 : vector<1x512xf32> to vector<4x512xf32>
    %10 = arith.mulf %7, %9 : vector<4x512xf32>
    %c4 = arith.constant 4 : index
    %c0_7 = arith.constant 0 : index
    %11 = vector.load %arg5[%c4, %c0_7] : memref<128x512xf32, #tpu.memory_space<vmem>>, vector<4x512xf32>
    tpu.vector_store %arg5[%c4, %c0_7], %10 {strides = array<i32>} : memref<128x512xf32, #tpu.memory_space<vmem>>, vector<4x512xf32>,
    %c71_i32 = arith.constant 71 : i32
    %12 = tpu.dynamic_rotate %1 by %c71_i32 dim 1 : vector<4x512xf32>, i32 -> vector<4x512xf32>
    %c2 = arith.constant 2 : index
    %c0_8 = arith.constant 0 : index
    %13 = vector.load %arg2[%c2, %c0_8] : memref<27x512xf32, #tpu.memory_space<vmem>>, vector<1x512xf32>
    %14 = vector.broadcast %13 : vector<1x512xf32> to vector<4x512xf32>
    %15 = arith.mulf %12, %14 : vector<4x512xf32>
    %c8 = arith.constant 8 : index
    %c0_9 = arith.constant 0 : index
    %16 = vector.load %arg5[%c8, %c0_9] : memref<128x512xf32, #tpu.memory_space<vmem>>, vector<4x512xf32>
    tpu.vector_store %arg5[%c8, %c0_9], %15 {strides = array<i32>} : memref<128x512xf32, #tpu.memory_space<vmem>>, vector<4x512xf32>,
    %c65_i32 = arith.constant 65 : i32
    %17 = tpu.dynamic_rotate %1 by %c65_i32 dim 1 : vector<4x512xf32>, i32 -> vector<4x512xf32>
    %c3 = arith.constant 3 : index
    %c0_10 = arith.constant 0 : index
    %18 = vector.load %arg2[%c3, %c0_10] : memref<27x512xf32, #tpu.memory_space<vmem>>, vector<1x512xf32>
    %19 = vector.broadcast %18 : vector<1x512xf32> to vector<4x512xf32>
    %20 = arith.mulf %17, %19 : vector<4x512xf32>
    %c12 = arith.constant 12 : index
    %c0_11 = arith.constant 0 : index
    %21 = vector.load %arg5[%c12, %c0_11] : memref<128x512xf32, #tpu.memory_space<vmem>>, vector<4x512xf32>
    tpu.vector_store %arg5[%c12, %c0_11], %20 {strides = array<i32>} : memref<128x512xf32, #tpu.memory_space<vmem>>, vector<4x512xf32>,
    %c64_i32 = arith.constant 64 : i32
    %22 = tpu.dynamic_rotate %1 by %c64_i32 dim 1 : vector<4x512xf32>, i32 -> vector<4x512xf32>
    %c4_12 = arith.constant 4 : index
    %c0_13 = arith.constant 0 : index
    %23 = vector.load %arg2[%c4_12, %c0_13] : memref<27x512xf32, #tpu.memory_space<vmem>>, vector<1x512xf32>
    %24 = vector.broadcast %23 : vector<1x512xf32> to vector<4x512xf32>
    %25 = arith.mulf %22, %24 : vector<4x512xf32>
    %c16 = arith.constant 16 : index
    %c0_14 = arith.constant 0 : index
    %26 = vector.load %arg5[%c16, %c0_14] : memref<128x512xf32, #tpu.memory_space<vmem>>, vector<4x512xf32>
    tpu.vector_store %arg5[%c16, %c0_14], %25 {strides = array<i32>} : memref<128x512xf32, #tpu.memory_space<vmem>>, vector<4x512xf32>,
    %c63_i32 = arith.constant 63 : i32
    %27 = tpu.dynamic_rotate %1 by %c63_i32 dim 1 : vector<4x512xf32>, i32 -> vector<4x512xf32>
    %c5 = arith.constant 5 : index
    %c0_15 = arith.constant 0 : index
    %28 = vector.load %arg2[%c5, %c0_15] : memref<27x512xf32, #tpu.memory_space<vmem>>, vector<1x512xf32>
    %29 = vector.broadcast %28 : vector<1x512xf32> to vector<4x512xf32>
    %30 = arith.mulf %27, %29 : vector<4x512xf32>
    %c20 = arith.constant 20 : index
    %c0_16 = arith.constant 0 : index
    %31 = vector.load %arg5[%c20, %c0_16] : memref<128x512xf32, #tpu.memory_space<vmem>>, vector<4x512xf32>
    tpu.vector_store %arg5[%c20, %c0_16], %30 {strides = array<i32>} : memref<128x512xf32, #tpu.memory_space<vmem>>, vector<4x512xf32>,
    %c57_i32 = arith.constant 57 : i32
    %32 = tpu.dynamic_rotate %1 by %c57_i32 dim 1 : vector<4x512xf32>, i32 -> vector<4x512xf32>
    %c6 = arith.constant 6 : index
    %c0_17 = arith.constant 0 : index
    %33 = vector.load %arg2[%c6, %c0_17] : memref<27x512xf32, #tpu.memory_space<vmem>>, vector<1x512xf32>
    %34 = vector.broadcast %33 : vector<1x512xf32> to vector<4x512xf32>
    %35 = arith.mulf %32, %34 : vector<4x512xf32>
    %c24 = arith.constant 24 : index
    %c0_18 = arith.constant 0 : index
    %36 = vector.load %arg5[%c24, %c0_18] : memref<128x512xf32, #tpu.memory_space<vmem>>, vector<4x512xf32>
    tpu.vector_store %arg5[%c24, %c0_18], %35 {strides = array<i32>} : memref<128x512xf32, #tpu.memory_space<vmem>>, vector<4x512xf32>,
    %c56_i32 = arith.constant 56 : i32
    %37 = tpu.dynamic_rotate %1 by %c56_i32 dim 1 : vector<4x512xf32>, i32 -> vector<4x512xf32>
    %c7 = arith.constant 7 : index
    %c0_19 = arith.constant 0 : index
    %38 = vector.load %arg2[%c7, %c0_19] : memref<27x512xf32, #tpu.memory_space<vmem>>, vector<1x512xf32>
    %39 = vector.broadcast %38 : vector<1x512xf32> to vector<4x512xf32>
    %40 = arith.mulf %37, %39 : vector<4x512xf32>
    %c28 = arith.constant 28 : index
    %c0_20 = arith.constant 0 : index
    %41 = vector.load %arg5[%c28, %c0_20] : memref<128x512xf32, #tpu.memory_space<vmem>>, vector<4x512xf32>
    tpu.vector_store %arg5[%c28, %c0_20], %40 {strides = array<i32>} : memref<128x512xf32, #tpu.memory_space<vmem>>, vector<4x512xf32>,
    %c55_i32 = arith.constant 55 : i32
    %42 = tpu.dynamic_rotate %1 by %c55_i32 dim 1 : vector<4x512xf32>, i32 -> vector<4x512xf32>
    %c8_21 = arith.constant 8 : index
    %c0_22 = arith.constant 0 : index
    %43 = vector.load %arg2[%c8_21, %c0_22] : memref<27x512xf32, #tpu.memory_space<vmem>>, vector<1x512xf32>
    %44 = vector.broadcast %43 : vector<1x512xf32> to vector<4x512xf32>
    %45 = arith.mulf %42, %44 : vector<4x512xf32>
    %c32 = arith.constant 32 : index
    %c0_23 = arith.constant 0 : index
    %46 = vector.load %arg5[%c32, %c0_23] : memref<128x512xf32, #tpu.memory_space<vmem>>, vector<4x512xf32>
    tpu.vector_store %arg5[%c32, %c0_23], %45 {strides = array<i32>} : memref<128x512xf32, #tpu.memory_space<vmem>>, vector<4x512xf32>,
    %c9_i32 = arith.constant 9 : i32
    %47 = tpu.dynamic_rotate %1 by %c9_i32 dim 1 : vector<4x512xf32>, i32 -> vector<4x512xf32>
    %c9 = arith.constant 9 : index
    %c0_24 = arith.constant 0 : index
    %48 = vector.load %arg2[%c9, %c0_24] : memref<27x512xf32, #tpu.memory_space<vmem>>, vector<1x512xf32>
    %49 = vector.broadcast %48 : vector<1x512xf32> to vector<4x512xf32>
    %50 = arith.mulf %47, %49 : vector<4x512xf32>
    %c36 = arith.constant 36 : index
    %c0_25 = arith.constant 0 : index
    %51 = vector.load %arg5[%c36, %c0_25] : memref<128x512xf32, #tpu.memory_space<vmem>>, vector<4x512xf32>
    tpu.vector_store %arg5[%c36, %c0_25], %50 {strides = array<i32>} : memref<128x512xf32, #tpu.memory_space<vmem>>, vector<4x512xf32>,
    %c8_i32 = arith.constant 8 : i32
    %52 = tpu.dynamic_rotate %1 by %c8_i32 dim 1 : vector<4x512xf32>, i32 -> vector<4x512xf32>
    %c10 = arith.constant 10 : index
    %c0_26 = arith.constant 0 : index
    %53 = vector.load %arg2[%c10, %c0_26] : memref<27x512xf32, #tpu.memory_space<vmem>>, vector<1x512xf32>
    %54 = vector.broadcast %53 : vector<1x512xf32> to vector<4x512xf32>
    %55 = arith.mulf %52, %54 : vector<4x512xf32>
    %c40 = arith.constant 40 : index
    %c0_27 = arith.constant 0 : index
    %56 = vector.load %arg5[%c40, %c0_27] : memref<128x512xf32, #tpu.memory_space<vmem>>, vector<4x512xf32>
    tpu.vector_store %arg5[%c40, %c0_27], %55 {strides = array<i32>} : memref<128x512xf32, #tpu.memory_space<vmem>>, vector<4x512xf32>,
    %c7_i32 = arith.constant 7 : i32
    %57 = tpu.dynamic_rotate %1 by %c7_i32 dim 1 : vector<4x512xf32>, i32 -> vector<4x512xf32>
    %c11 = arith.constant 11 : index
    %c0_28 = arith.constant 0 : index
    %58 = vector.load %arg2[%c11, %c0_28] : memref<27x512xf32, #tpu.memory_space<vmem>>, vector<1x512xf32>
    %59 = vector.broadcast %58 : vector<1x512xf32> to vector<4x512xf32>
    %60 = arith.mulf %57, %59 : vector<4x512xf32>
    %c44 = arith.constant 44 : index
    %c0_29 = arith.constant 0 : index
    %61 = vector.load %arg5[%c44, %c0_29] : memref<128x512xf32, #tpu.memory_space<vmem>>, vector<4x512xf32>
    tpu.vector_store %arg5[%c44, %c0_29], %60 {strides = array<i32>} : memref<128x512xf32, #tpu.memory_space<vmem>>, vector<4x512xf32>,
    %c1_i32 = arith.constant 1 : i32
    %62 = tpu.dynamic_rotate %1 by %c1_i32 dim 1 : vector<4x512xf32>, i32 -> vector<4x512xf32>
    %c12_30 = arith.constant 12 : index
    %c0_31 = arith.constant 0 : index
    %63 = vector.load %arg2[%c12_30, %c0_31] : memref<27x512xf32, #tpu.memory_space<vmem>>, vector<1x512xf32>
    %64 = vector.broadcast %63 : vector<1x512xf32> to vector<4x512xf32>
    %65 = arith.mulf %62, %64 : vector<4x512xf32>
    %c48 = arith.constant 48 : index
    %c0_32 = arith.constant 0 : index
    %66 = vector.load %arg5[%c48, %c0_32] : memref<128x512xf32, #tpu.memory_space<vmem>>, vector<4x512xf32>
    tpu.vector_store %arg5[%c48, %c0_32], %65 {strides = array<i32>} : memref<128x512xf32, #tpu.memory_space<vmem>>, vector<4x512xf32>,
    %c52 = arith.constant 52 : index
    %c0_33 = arith.constant 0 : index
    %67 = vector.load %arg5[%c52, %c0_33] : memref<128x512xf32, #tpu.memory_space<vmem>>, vector<4x512xf32>
    tpu.vector_store %arg5[%c52, %c0_33], %1 {strides = array<i32>} : memref<128x512xf32, #tpu.memory_space<vmem>>, vector<4x512xf32>,
    %c511_i32 = arith.constant 511 : i32
    %68 = tpu.dynamic_rotate %1 by %c511_i32 dim 1 : vector<4x512xf32>, i32 -> vector<4x512xf32>
    %c14 = arith.constant 14 : index
    %c0_34 = arith.constant 0 : index
    %69 = vector.load %arg2[%c14, %c0_34] : memref<27x512xf32, #tpu.memory_space<vmem>>, vector<1x512xf32>
    %70 = vector.broadcast %69 : vector<1x512xf32> to vector<4x512xf32>
    %71 = arith.mulf %68, %70 : vector<4x512xf32>
    %c56 = arith.constant 56 : index
    %c0_35 = arith.constant 0 : index
    %72 = vector.load %arg5[%c56, %c0_35] : memref<128x512xf32, #tpu.memory_space<vmem>>, vector<4x512xf32>
    tpu.vector_store %arg5[%c56, %c0_35], %71 {strides = array<i32>} : memref<128x512xf32, #tpu.memory_space<vmem>>, vector<4x512xf32>,
    %c505_i32 = arith.constant 505 : i32
    %73 = tpu.dynamic_rotate %1 by %c505_i32 dim 1 : vector<4x512xf32>, i32 -> vector<4x512xf32>
    %c15 = arith.constant 15 : index
    %c0_36 = arith.constant 0 : index
    %74 = vector.load %arg2[%c15, %c0_36] : memref<27x512xf32, #tpu.memory_space<vmem>>, vector<1x512xf32>
    %75 = vector.broadcast %74 : vector<1x512xf32> to vector<4x512xf32>
    %76 = arith.mulf %73, %75 : vector<4x512xf32>
    %c60 = arith.constant 60 : index
    %c0_37 = arith.constant 0 : index
    %77 = vector.load %arg5[%c60, %c0_37] : memref<128x512xf32, #tpu.memory_space<vmem>>, vector<4x512xf32>
    tpu.vector_store %arg5[%c60, %c0_37], %76 {strides = array<i32>} : memref<128x512xf32, #tpu.memory_space<vmem>>, vector<4x512xf32>,
    %c504_i32 = arith.constant 504 : i32
    %78 = tpu.dynamic_rotate %1 by %c504_i32 dim 1 : vector<4x512xf32>, i32 -> vector<4x512xf32>
    %c16_38 = arith.constant 16 : index
    %c0_39 = arith.constant 0 : index
    %79 = vector.load %arg2[%c16_38, %c0_39] : memref<27x512xf32, #tpu.memory_space<vmem>>, vector<1x512xf32>
    %80 = vector.broadcast %79 : vector<1x512xf32> to vector<4x512xf32>
    %81 = arith.mulf %78, %80 : vector<4x512xf32>
    %c64 = arith.constant 64 : index
    %c0_40 = arith.constant 0 : index
    %82 = vector.load %arg5[%c64, %c0_40] : memref<128x512xf32, #tpu.memory_space<vmem>>, vector<4x512xf32>
    tpu.vector_store %arg5[%c64, %c0_40], %81 {strides = array<i32>} : memref<128x512xf32, #tpu.memory_space<vmem>>, vector<4x512xf32>,
    %c503_i32 = arith.constant 503 : i32
    %83 = tpu.dynamic_rotate %1 by %c503_i32 dim 1 : vector<4x512xf32>, i32 -> vector<4x512xf32>
    %c17 = arith.constant 17 : index
    %c0_41 = arith.constant 0 : index
    %84 = vector.load %arg2[%c17, %c0_41] : memref<27x512xf32, #tpu.memory_space<vmem>>, vector<1x512xf32>
    %85 = vector.broadcast %84 : vector<1x512xf32> to vector<4x512xf32>
    %86 = arith.mulf %83, %85 : vector<4x512xf32>
    %c68 = arith.constant 68 : index
    %c0_42 = arith.constant 0 : index
    %87 = vector.load %arg5[%c68, %c0_42] : memref<128x512xf32, #tpu.memory_space<vmem>>, vector<4x512xf32>
    tpu.vector_store %arg5[%c68, %c0_42], %86 {strides = array<i32>} : memref<128x512xf32, #tpu.memory_space<vmem>>, vector<4x512xf32>,
    %c457_i32 = arith.constant 457 : i32
    %88 = tpu.dynamic_rotate %1 by %c457_i32 dim 1 : vector<4x512xf32>, i32 -> vector<4x512xf32>
    %c18 = arith.constant 18 : index
    %c0_43 = arith.constant 0 : index
    %89 = vector.load %arg2[%c18, %c0_43] : memref<27x512xf32, #tpu.memory_space<vmem>>, vector<1x512xf32>
    %90 = vector.broadcast %89 : vector<1x512xf32> to vector<4x512xf32>
    %91 = arith.mulf %88, %90 : vector<4x512xf32>
    %c72 = arith.constant 72 : index
    %c0_44 = arith.constant 0 : index
    %92 = vector.load %arg5[%c72, %c0_44] : memref<128x512xf32, #tpu.memory_space<vmem>>, vector<4x512xf32>
    tpu.vector_store %arg5[%c72, %c0_44], %91 {strides = array<i32>} : memref<128x512xf32, #tpu.memory_space<vmem>>, vector<4x512xf32>,
    %c456_i32 = arith.constant 456 : i32
    %93 = tpu.dynamic_rotate %1 by %c456_i32 dim 1 : vector<4x512xf32>, i32 -> vector<4x512xf32>
    %c19 = arith.constant 19 : index
    %c0_45 = arith.constant 0 : index
    %94 = vector.load %arg2[%c19, %c0_45] : memref<27x512xf32, #tpu.memory_space<vmem>>, vector<1x512xf32>
    %95 = vector.broadcast %94 : vector<1x512xf32> to vector<4x512xf32>
    %96 = arith.mulf %93, %95 : vector<4x512xf32>
    %c76 = arith.constant 76 : index
    %c0_46 = arith.constant 0 : index
    %97 = vector.load %arg5[%c76, %c0_46] : memref<128x512xf32, #tpu.memory_space<vmem>>, vector<4x512xf32>
    tpu.vector_store %arg5[%c76, %c0_46], %96 {strides = array<i32>} : memref<128x512xf32, #tpu.memory_space<vmem>>, vector<4x512xf32>,
    %c455_i32 = arith.constant 455 : i32
    %98 = tpu.dynamic_rotate %1 by %c455_i32 dim 1 : vector<4x512xf32>, i32 -> vector<4x512xf32>
    %c20_47 = arith.constant 20 : index
    %c0_48 = arith.constant 0 : index
    %99 = vector.load %arg2[%c20_47, %c0_48] : memref<27x512xf32, #tpu.memory_space<vmem>>, vector<1x512xf32>
    %100 = vector.broadcast %99 : vector<1x512xf32> to vector<4x512xf32>
    %101 = arith.mulf %98, %100 : vector<4x512xf32>
    %c80 = arith.constant 80 : index
    %c0_49 = arith.constant 0 : index
    %102 = vector.load %arg5[%c80, %c0_49] : memref<128x512xf32, #tpu.memory_space<vmem>>, vector<4x512xf32>
    tpu.vector_store %arg5[%c80, %c0_49], %101 {strides = array<i32>} : memref<128x512xf32, #tpu.memory_space<vmem>>, vector<4x512xf32>,
    %c449_i32 = arith.constant 449 : i32
    %103 = tpu.dynamic_rotate %1 by %c449_i32 dim 1 : vector<4x512xf32>, i32 -> vector<4x512xf32>
    %c21 = arith.constant 21 : index
    %c0_50 = arith.constant 0 : index
    %104 = vector.load %arg2[%c21, %c0_50] : memref<27x512xf32, #tpu.memory_space<vmem>>, vector<1x512xf32>
    %105 = vector.broadcast %104 : vector<1x512xf32> to vector<4x512xf32>
    %106 = arith.mulf %103, %105 : vector<4x512xf32>
    %c84 = arith.constant 84 : index
    %c0_51 = arith.constant 0 : index
    %107 = vector.load %arg5[%c84, %c0_51] : memref<128x512xf32, #tpu.memory_space<vmem>>, vector<4x512xf32>
    tpu.vector_store %arg5[%c84, %c0_51], %106 {strides = array<i32>} : memref<128x512xf32, #tpu.memory_space<vmem>>, vector<4x512xf32>,
    %c448_i32 = arith.constant 448 : i32
    %108 = tpu.dynamic_rotate %1 by %c448_i32 dim 1 : vector<4x512xf32>, i32 -> vector<4x512xf32>
    %c22 = arith.constant 22 : index
    %c0_52 = arith.constant 0 : index
    %109 = vector.load %arg2[%c22, %c0_52] : memref<27x512xf32, #tpu.memory_space<vmem>>, vector<1x512xf32>
    %110 = vector.broadcast %109 : vector<1x512xf32> to vector<4x512xf32>
    %111 = arith.mulf %108, %110 : vector<4x512xf32>
    %c88 = arith.constant 88 : index
    %c0_53 = arith.constant 0 : index
    %112 = vector.load %arg5[%c88, %c0_53] : memref<128x512xf32, #tpu.memory_space<vmem>>, vector<4x512xf32>
    tpu.vector_store %arg5[%c88, %c0_53], %111 {strides = array<i32>} : memref<128x512xf32, #tpu.memory_space<vmem>>, vector<4x512xf32>,
    %c447_i32 = arith.constant 447 : i32
    %113 = tpu.dynamic_rotate %1 by %c447_i32 dim 1 : vector<4x512xf32>, i32 -> vector<4x512xf32>
    %c23 = arith.constant 23 : index
    %c0_54 = arith.constant 0 : index
    %114 = vector.load %arg2[%c23, %c0_54] : memref<27x512xf32, #tpu.memory_space<vmem>>, vector<1x512xf32>
    %115 = vector.broadcast %114 : vector<1x512xf32> to vector<4x512xf32>
    %116 = arith.mulf %113, %115 : vector<4x512xf32>
    %c92 = arith.constant 92 : index
    %c0_55 = arith.constant 0 : index
    %117 = vector.load %arg5[%c92, %c0_55] : memref<128x512xf32, #tpu.memory_space<vmem>>, vector<4x512xf32>
    tpu.vector_store %arg5[%c92, %c0_55], %116 {strides = array<i32>} : memref<128x512xf32, #tpu.memory_space<vmem>>, vector<4x512xf32>,
    %c441_i32 = arith.constant 441 : i32
    %118 = tpu.dynamic_rotate %1 by %c441_i32 dim 1 : vector<4x512xf32>, i32 -> vector<4x512xf32>
    %c24_56 = arith.constant 24 : index
    %c0_57 = arith.constant 0 : index
    %119 = vector.load %arg2[%c24_56, %c0_57] : memref<27x512xf32, #tpu.memory_space<vmem>>, vector<1x512xf32>
    %120 = vector.broadcast %119 : vector<1x512xf32> to vector<4x512xf32>
    %121 = arith.mulf %118, %120 : vector<4x512xf32>
    %c96 = arith.constant 96 : index
    %c0_58 = arith.constant 0 : index
    %122 = vector.load %arg5[%c96, %c0_58] : memref<128x512xf32, #tpu.memory_space<vmem>>, vector<4x512xf32>
    tpu.vector_store %arg5[%c96, %c0_58], %121 {strides = array<i32>} : memref<128x512xf32, #tpu.memory_space<vmem>>, vector<4x512xf32>,
    %c440_i32 = arith.constant 440 : i32
    %123 = tpu.dynamic_rotate %1 by %c440_i32 dim 1 : vector<4x512xf32>, i32 -> vector<4x512xf32>
    %c25 = arith.constant 25 : index
    %c0_59 = arith.constant 0 : index
    %124 = vector.load %arg2[%c25, %c0_59] : memref<27x512xf32, #tpu.memory_space<vmem>>, vector<1x512xf32>
    %125 = vector.broadcast %124 : vector<1x512xf32> to vector<4x512xf32>
    %126 = arith.mulf %123, %125 : vector<4x512xf32>
    %c100 = arith.constant 100 : index
    %c0_60 = arith.constant 0 : index
    %127 = vector.load %arg5[%c100, %c0_60] : memref<128x512xf32, #tpu.memory_space<vmem>>, vector<4x512xf32>
    tpu.vector_store %arg5[%c100, %c0_60], %126 {strides = array<i32>} : memref<128x512xf32, #tpu.memory_space<vmem>>, vector<4x512xf32>,
    %c439_i32 = arith.constant 439 : i32
    %128 = tpu.dynamic_rotate %1 by %c439_i32 dim 1 : vector<4x512xf32>, i32 -> vector<4x512xf32>
    %c26 = arith.constant 26 : index
    %c0_61 = arith.constant 0 : index
    %129 = vector.load %arg2[%c26, %c0_61] : memref<27x512xf32, #tpu.memory_space<vmem>>, vector<1x512xf32>
    %130 = vector.broadcast %129 : vector<1x512xf32> to vector<4x512xf32>
    %131 = arith.mulf %128, %130 : vector<4x512xf32>
    %c104 = arith.constant 104 : index
    %c0_62 = arith.constant 0 : index
    %132 = vector.load %arg5[%c104, %c0_62] : memref<128x512xf32, #tpu.memory_space<vmem>>, vector<4x512xf32>
    tpu.vector_store %arg5[%c104, %c0_62], %131 {strides = array<i32>} : memref<128x512xf32, #tpu.memory_space<vmem>>, vector<4x512xf32>,
    %cst = arith.constant 0.000000e+00 : f32
    %133 = vector.broadcast %cst : f32 to vector<20x512xf32>
    %c108 = arith.constant 108 : index
    %c0_63 = arith.constant 0 : index
    %134 = vector.load %arg5[%c108, %c0_63] : memref<128x512xf32, #tpu.memory_space<vmem>>, vector<20x512xf32>
    tpu.vector_store %arg5[%c108, %c0_63], %133 {strides = array<i32>} : memref<128x512xf32, #tpu.memory_space<vmem>>, vector<20x512xf32>,
    %cst_64 = arith.constant 1.000000e+00 : f32
    %135 = vector.broadcast %cst_64 : f32 to vector<1x512xf32>
    %c108_65 = arith.constant 108 : index
    %c0_66 = arith.constant 0 : index
    %136 = vector.load %arg5[%c108_65, %c0_66] : memref<128x512xf32, #tpu.memory_space<vmem>>, vector<1x512xf32>
    tpu.vector_store %arg5[%c108_65, %c0_66], %135 {strides = array<i32>} : memref<128x512xf32, #tpu.memory_space<vmem>>, vector<1x512xf32>,
    %c0_67 = arith.constant 0 : index
    %c0_68 = arith.constant 0 : index
    %137 = vector.load %arg3[%c0_67, %c0_68] : memref<4x128xf32, #tpu.memory_space<vmem>>, vector<4x128xf32>
    %c0_69 = arith.constant 0 : index
    %c0_70 = arith.constant 0 : index
    %138 = vector.load %arg5[%c0_69, %c0_70] : memref<128x512xf32, #tpu.memory_space<vmem>>, vector<128x512xf32>
    %cst_71 = arith.constant dense<0.000000e+00> : vector<4x512xf32>
    %139 = tpu.matmul %137, %138, %cst_71 {dimension_numbers = #tpu.dot_dimension_numbers<[1], [0], [0], [1], [0, 0, 1, 1], [], []>} : vector<4x128xf32>, vector<128x512xf32>, vector<4x512xf32> -> vector<4x512xf32>
    %140 = arith.negf %139 : vector<4x512xf32>
    %141 = math.exp %140 : vector<4x512xf32>
    %cst_72 = arith.constant 1.000000e+00 : f32
    %142 = vector.broadcast %cst_72 : f32 to vector<4x512xf32>
    %143 = arith.addf %142, %141 : vector<4x512xf32>
    %144 = arith.divf %142, %143 : vector<4x512xf32>
    %c0_73 = arith.constant 0 : index
    %c0_74 = arith.constant 0 : index
    %c0_75 = arith.constant 0 : index
    %145 = vector.load %arg4[%c0_73, %c0_74, %c0_75] : memref<1x4x512xf32, #tpu.memory_space<vmem>>, vector<1x4x512xf32>
    %146 = vector.shape_cast %145 : vector<1x4x512xf32> to vector<4x512xf32>
    %147 = vector.shape_cast %144 : vector<4x512xf32> to vector<1x4x512xf32>
    tpu.vector_store %arg4[%c0_73, %c0_74, %c0_75], %147 {strides = array<i32>} : memref<1x4x512xf32, #tpu.memory_space<vmem>>, vector<1x4x512xf32>,
    return
  }
  func.func @transform_0(%arg0: i32) -> (i32, i32, i32) {
    %c0_i32 = arith.constant 0 : i32
    %c0_i32_0 = arith.constant 0 : i32
    %c0_i32_1 = arith.constant 0 : i32
    return %arg0, %c0_i32, %c0_i32_0 : i32, i32, i32
  }
  func.func @transform_1(%arg0: i32) -> (i32, i32) {
    %c0_i32 = arith.constant 0 : i32
    %c0_i32_0 = arith.constant 0 : i32
    %c0_i32_1 = arith.constant 0 : i32
    return %c0_i32, %c0_i32_0 : i32, i32
  }
  func.func @transform_2(%arg0: i32) -> (i32, i32) {
    %c0_i32 = arith.constant 0 : i32
    %c0_i32_0 = arith.constant 0 : i32
    %c0_i32_1 = arith.constant 0 : i32
    return %c0_i32, %c0_i32_0 : i32, i32
  }
  func.func @transform_3(%arg0: i32) -> (i32, i32, i32) {
    %c0_i32 = arith.constant 0 : i32
    %c0_i32_0 = arith.constant 0 : i32
    %c0_i32_1 = arith.constant 0 : i32
    return %arg0, %c0_i32, %c0_i32_0 : i32, i32, i32
  }
}

</mosaic_0001>

<llo_original>
// kernel: query_attention_module.1
$region0: #{query_attention_module.1}
  #allocation0 [shape = 'u32[]', space=smem, size = 0x4, offset = 0x4, fixed_abs, tag = 'smem constant byte address 0x4 - core index']
  #allocation1 [shape = 'u32[144,128]{1,0:T(1,128)}', space=vmem, size = 0x12000, scoped, tag = 'internal scratch']
  #allocation2 [shape = 'f32[128,512]{1,0:T(8,128)}', space=vmem, size = 0x40000, scoped, tag = 'scratch operand']
  %s0 = inlined_call_operand.vmem [shape: f32[2,4,512], index: 0, kind: input, shape index: {}]
  %s1 = inlined_call_operand.vmem [shape: f32[27,512], index: 1, kind: input, shape index: {}]
  %s2 = inlined_call_operand.vmem [shape: f32[4,128], index: 2, kind: input, shape index: {}]
  %s3 = inlined_call_operand.vmem [shape: f32[2,4,512], index: 3, kind: output, shape index: {}]
  %s4 = sld [smem:[#allocation0]]
  $region45: #{query_attention_module.1} parent=0
    _
  %s6 = ssub.s32 1, %s4
  %s7 = scalar_select 0, %s6, %s4
  loop: start=0, step=1, limit=4
  $region2: #{query_attention_module.1} parent=0 // loop_pre_header
    _
  $region3: #{query_attention_module.1} parent=0 // loop_header
    %s9 = sphi 0, %s13
    %p10 = scmp.ge.s32.totalorder %s9, 4
    %s19 = sphi 0, %s21
    %s22 = sphi 0, %s19
    %s23 = sphi 0, %s22
    %s39 = sphi 0, %s23
    %s43 = sphi 0, %s43
    %s45 = sphi 0, %s43
    %s46 = sphi 0, %s45
    %s60 = sphi 0, %s46
    %s64 = sphi 0, %s64
    %s66 = sphi 0, %s64
    %s67 = sphi 0, %s66
    %s81 = sphi 0, %s67
    %s87 = sphi 0, %s89
    %s90 = sphi 0, %s87
    %s91 = sphi 0, %s90
    %s107 = sphi 0, %s91
  $region4: #{query_attention_module.1} parent=0 // loop_header_branch
    %12 = sbr.rel (%p10) target = $region8
  $region5: #{query_attention_module.1} parent=0 // loop_body
    %s14 = ssub.s32 %s9, 1
    %s15 = ssub.s32 %s9, 2
    %s16 = sadd.s32 %s9, 1
    %s17 = ssub.s32 %s9, %s16
    %p18 = scmp.eq.s32.totalorder %s17, 0
    %s20 = sadd.s32 %s19, 1
    %s21 = scalar_select %p18, %s19, %s20
    %p24 = pneg %p18
    %p25 = scmp.eq.s32.totalorder %s9, 1
    %p26 = por %p24, %p25
    %p27 = scmp.ne.s32.totalorder %s19, %s22
    %p28 = scmp.eq.s32.totalorder %s9, 0
    %p29 = por %p27, %p28
    %p30 = scmp.ne.s32.totalorder %s19, %s22
    %p31 = scmp.eq.s32.totalorder %s14, 1
    %p32 = por %p30, %p31
    %p33 = scmp.ne.s32.totalorder %s22, %s23
    %p34 = scmp.eq.s32.totalorder %s14, 0
    %p35 = por %p33, %p34
    %p36 = scmp.ne.s32.totalorder %s22, %s23
    %p37 = scmp.eq.s32.totalorder %s15, 1
    %p38 = por %p36, %p37
    %p40 = scmp.ne.s32.totalorder %s23, %s39
    %p41 = scmp.eq.s32.totalorder %s15, 0
    %p42 = por %p40, %p41
    %s44 = sadd.s32 %s43, 1
    %p47 = scmp.eq.s32.totalorder %s9, 1
    %p48 = scmp.ne.s32.totalorder %s43, %s45
    %p49 = scmp.eq.s32.totalorder %s9, 0
    %p50 = por %p48, %p49
    %p51 = scmp.ne.s32.totalorder %s43, %s45
    %p52 = scmp.eq.s32.totalorder %s14, 1
    %p53 = por %p51, %p52
    %p54 = scmp.ne.s32.totalorder %s45, %s46
    %p55 = scmp.eq.s32.totalorder %s14, 0
    %p56 = por %p54, %p55
    %p57 = scmp.ne.s32.totalorder %s45, %s46
    %p58 = scmp.eq.s32.totalorder %s15, 1
    %p59 = por %p57, %p58
    %p61 = scmp.ne.s32.totalorder %s46, %s60
    %p62 = scmp.eq.s32.totalorder %s15, 0
    %p63 = por %p61, %p62
    %s65 = sadd.s32 %s64, 1
    %p68 = scmp.eq.s32.totalorder %s9, 1
    %p69 = scmp.ne.s32.totalorder %s64, %s66
    %p70 = scmp.eq.s32.totalorder %s9, 0
    %p71 = por %p69, %p70
    %p72 = scmp.ne.s32.totalorder %s64, %s66
    %p73 = scmp.eq.s32.totalorder %s14, 1
    %p74 = por %p72, %p73
    %p75 = scmp.ne.s32.totalorder %s66, %s67
    %p76 = scmp.eq.s32.totalorder %s14, 0
    %p77 = por %p75, %p76
    %p78 = scmp.ne.s32.totalorder %s66, %s67
    %p79 = scmp.eq.s32.totalorder %s15, 1
    %p80 = por %p78, %p79
    %p82 = scmp.ne.s32.totalorder %s67, %s81
    %p83 = scmp.eq.s32.totalorder %s15, 0
    %p84 = por %p82, %p83
    %s85 = ssub.s32 %s9, %s16
    %p86 = scmp.eq.s32.totalorder %s85, 0
    %s88 = sadd.s32 %s87, 1
    %s89 = scalar_select %p86, %s87, %s88
    %p92 = pneg %p86
    %p93 = scmp.eq.s32.totalorder %s9, 1
    %p94 = por %p92, %p93
    %p95 = scmp.ne.s32.totalorder %s87, %s90
    %p96 = scmp.eq.s32.totalorder %s9, 0
    %p97 = por %p95, %p96
    %p98 = scmp.ne.s32.totalorder %s87, %s90
    %p99 = scmp.eq.s32.totalorder %s14, 1
    %p100 = por %p98, %p99
    %p101 = scmp.ne.s32.totalorder %s90, %s91
    %p102 = scmp.eq.s32.totalorder %s14, 0
    %p103 = por %p101, %p102
    %p104 = scmp.ne.s32.totalorder %s90, %s91
    %p105 = scmp.eq.s32.totalorder %s15, 1
    %p106 = por %p104, %p105
    %p108 = scmp.ne.s32.totalorder %s91, %s107
    %p109 = scmp.eq.s32.totalorder %s15, 0
    %p110 = por %p108, %p109
    %p111 = scmp.le.s32.totalorder 1, %s9
    %p112 = scmp.lt.s32.totalorder %s9, 3
    %p113 = pnand %p111, %p112
    %p114 = pneg %p113
    // Predicated region
    $region9: #{query_attention_module.1} parent=5 // pred_check
      _
    $region10: #{query_attention_module.1} parent=5 // pred_check_branch
      %116 = sbr.rel (%p113) target = $region12
    $region11: #{query_attention_module.1} parent=5 // pred_region
      %s117 = ssub.s32 %s9, 1
      // Predicated region
      $region13: #{query_attention_module.1} parent=11 // pred_check
        %p118 = pneg %p56
      $region14: #{query_attention_module.1} parent=11 // pred_check_branch
        %120 = sbr.rel (%p118) target = $region16
      $region15: #{query_attention_module.1} parent=11 // pred_region
        _
      $region16: #{query_attention_module.1} parent=11 // pred_fallthru
        _
      // Predicated region
      $region17: #{query_attention_module.1} parent=11 // pred_check
        %p121 = pneg %p77
      $region18: #{query_attention_module.1} parent=11 // pred_check_branch
        %123 = sbr.rel (%p121) target = $region20
      $region19: #{query_attention_module.1} parent=11 // pred_region
        _
      $region20: #{query_attention_module.1} parent=11 // pred_fallthru
        _
    $region12: #{query_attention_module.1} parent=5 // pred_fallthru
      _
    %p124 = scmp.lt.s32.totalorder %s9, 2
    // Predicated region
    $region21: #{query_attention_module.1} parent=5 // pred_check
      %p125 = pneg %p124
    $region22: #{query_attention_module.1} parent=5 // pred_check_branch
      %127 = sbr.rel (%p125) target = $region24
    $region23: #{query_attention_module.1} parent=5 // pred_region
      // Predicated region
      $region25: #{query_attention_module.1} parent=23 // pred_check
        %p128 = pneg %p29
      $region26: #{query_attention_module.1} parent=23 // pred_check_branch
        %130 = sbr.rel (%p128) target = $region28
      $region27: #{query_attention_module.1} parent=23 // pred_region
        %p131 = scmp.lt.s32.totalorder %s9, 1
        %s132 = scalar_select %p131, %s9, 1
        %s133 = smul.addr %s132, 4
        %s134 = smul.addr %s133, 4
        %s135 = scalar_lea.vmem %s0, %s134
      $region28: #{query_attention_module.1} parent=23 // pred_fallthru
        _
    $region24: #{query_attention_module.1} parent=5 // pred_fallthru
      _
    %p136 = scmp.le.s32.totalorder 1, %s9
    %p137 = scmp.lt.s32.totalorder %s9, 3
    %p138 = pnand %p136, %p137
    %p139 = pneg %p138
    // Predicated region
    $region29: #{query_attention_module.1} parent=5 // pred_check
      _
    $region30: #{query_attention_module.1} parent=5 // pred_check_branch
      %141 = sbr.rel (%p138) target = $region32
    $region31: #{query_attention_module.1} parent=5 // pred_region
      %s142 = ssub.s32 %s9, 1
      %p143 = scmp.lt.s32.totalorder %s14, 1
      %s144 = scalar_select %p143, %s14, 1
      %s145 = smul.addr %s144, 4
      %s146 = smul.addr %s145, 4
      %s147 = scalar_lea.vmem %s0, %s146
      %p148 = pneg %p35
      %p149 = pneg %p32
      %p150 = pneg %p56
      %p151 = pneg %p53
      %p152 = pneg %p77
      %p153 = pneg %p74
      %p154 = pneg %p103
      %p155 = pneg %p100
      %p156 = scmp.lt.s32.totalorder %s14, 1
      %s157 = scalar_select %p156, %s14, 1
      %s158 = smul.addr %s157, 4
      %s159 = smul.addr %s158, 4
      %s160 = scalar_lea.vmem %s3, %s159
      %p161 = scmp.lt.s32.totalorder %s14, 1
      %s162 = scalar_select %p161, %s14, 1
      %s163 = smul.addr %s162, 4
      %s164 = smul.addr %s163, 4
      %s165 = scalar_lea.vmem %s0, %s164
      %p166 = scmp.lt.s32.totalorder %s14, 1
      %s167 = scalar_select %p166, %s14, 1
      %s168 = smul.addr %s167, 4
      %s169 = smul.addr %s168, 4
      %s170 = scalar_lea.vmem %s3, %s169
      %v171 = vld [vmem:[%s165] sm:$0xff]
      %v172 = vld [vmem:[%s165 + $0x8] sm:$0xff]
      %v175 = vcombine.high %v171, %v171
      %v176 = vcombine.high %v172, %v172
      %179 = vrot.lane.b32.xlu0 %v171, 73
      %v180 = vpop.permute.xlu0 %179
      %181 = vrot.lane.b32.xlu0 %v175, 73
      %v182 = vpop.permute.xlu0 %181
      %183 = vrot.lane.b32.xlu0 %v172, 73
      %v184 = vpop.permute.xlu0 %183
      %185 = vrot.lane.b32.xlu0 %v176, 73
      %v186 = vpop.permute.xlu0 %185
      %v187 = vlaneseq
      %v188 = vand.u32 %v187, 127
      %vm189 = vcmp.lt.s32.totalorder %v188, 73
      %v190 = vsel %vm189, %v184, %v186
      %v191 = vsel %vm189, %v182, %v184
      %v192 = vsel %vm189, %v180, %v182
      %v193 = vsel %vm189, %v186, %v180
      %v194 = vld [vmem:[%s1] ss:$8 sm:$0xf]
      %v196 = vlaneseq
      %v197 = vshrl.u32 %v196, 7
      %v198 = vsub.s32 0, %v197
      %v199 = vrot.slane %v194, %v198
      %v200 = vlaneseq
      %v201 = vshrl.u32 %v200, 7
      %v202 = vsub.s32 1, %v201
      %v203 = vrot.slane %v194, %v202
      %v204 = vlaneseq
      %v205 = vshrl.u32 %v204, 7
      %v206 = vsub.s32 2, %v205
      %v207 = vrot.slane %v194, %v206
      %v208 = vlaneseq
      %v209 = vshrl.u32 %v208, 7
      %v210 = vsub.s32 3, %v209
      %v211 = vrot.slane %v194, %v210
      %v216 = vmul.f32 %v193, %v199
      %v217 = vmul.f32 %v192, %v203
      %v218 = vmul.f32 %v191, %v207
      %v219 = vmul.f32 %v190, %v211
      %220 = vst [vmem:[#allocation2] sm:$0xf] %v216
      %221 = vst [vmem:[#allocation2 + $0x8] sm:$0xf] %v217
      %222 = vst [vmem:[#allocation2 + $0x10] sm:$0xf] %v218
      %223 = vst [vmem:[#allocation2 + $0x18] sm:$0xf] %v219
      %224 = vrot.lane.b32.xlu0 %v171, 72
      %v225 = vpop.permute.xlu0 %224
      %226 = vrot.lane.b32.xlu0 %v175, 72
      %v227 = vpop.permute.xlu0 %226
      %228 = vrot.lane.b32.xlu0 %v172, 72
      %v229 = vpop.permute.xlu0 %228
      %230 = vrot.lane.b32.xlu0 %v176, 72
      %v231 = vpop.permute.xlu0 %230
      %vm232 = vcmp.lt.s32.totalorder %v188, 72
      %v233 = vsel %vm232, %v229, %v231
      %v234 = vsel %vm232, %v227, %v229
      %v235 = vsel %vm232, %v225, %v227
      %v236 = vsel %vm232, %v231, %v225
      %s237 = scalar_lea.vmem %s1, 1
      %v238 = vld [vmem:[%s237] ss:$8 sm:$0xf]
      %v240 = vlaneseq
      %v241 = vshrl.u32 %v240, 7
      %v242 = vsub.s32 0, %v241
      %v243 = vrot.slane %v238, %v242
      %v244 = vlaneseq
      %v245 = vshrl.u32 %v244, 7
      %v246 = vsub.s32 1, %v245
      %v247 = vrot.slane %v238, %v246
      %v248 = vlaneseq
      %v249 = vshrl.u32 %v248, 7
      %v250 = vsub.s32 2, %v249
      %v251 = vrot.slane %v238, %v250
      %v252 = vlaneseq
      %v253 = vshrl.u32 %v252, 7
      %v254 = vsub.s32 3, %v253
      %v255 = vrot.slane %v238, %v254
      %v260 = vmul.f32 %v236, %v243
      %v261 = vmul.f32 %v235, %v247
      %v262 = vmul.f32 %v234, %v251
      %v263 = vmul.f32 %v233, %v255
      %v268 = vrot.slane %v260, 4
      %v269 = vrot.slane %v261, 4
      %v270 = vrot.slane %v262, 4
      %v271 = vrot.slane %v263, 4
      %276 = vst [vmem:[#allocation2] sm:$0xf0] %v268
      %277 = vst [vmem:[#allocation2 + $0x8] sm:$0xf0] %v269
      %278 = vst [vmem:[#allocation2 + $0x10] sm:$0xf0] %v270
      %279 = vst [vmem:[#allocation2 + $0x18] sm:$0xf0] %v271
      %280 = vrot.lane.b32.xlu0 %v171, 71
      %v281 = vpop.permute.xlu0 %280
      %282 = vrot.lane.b32.xlu0 %v175, 71
      %v283 = vpop.permute.xlu0 %282
      %284 = vrot.lane.b32.xlu0 %v172, 71
      %v285 = vpop.permute.xlu0 %284
      %286 = vrot.lane.b32.xlu0 %v176, 71
      %v287 = vpop.permute.xlu0 %286
      %vm288 = vcmp.lt.s32.totalorder %v188, 71
      %v289 = vsel %vm288, %v285, %v287
      %v290 = vsel %vm288, %v283, %v285
      %v291 = vsel %vm288, %v281, %v283
      %v292 = vsel %vm288, %v287, %v281
      %s293 = scalar_lea.vmem %s1, 2
      %v294 = vld [vmem:[%s293] ss:$8 sm:$0xf]
      %v296 = vlaneseq
      %v297 = vshrl.u32 %v296, 7
      %v298 = vsub.s32 0, %v297
      %v299 = vrot.slane %v294, %v298
      %v300 = vlaneseq
      %v301 = vshrl.u32 %v300, 7
      %v302 = vsub.s32 1, %v301
      %v303 = vrot.slane %v294, %v302
      %v304 = vlaneseq
      %v305 = vshrl.u32 %v304, 7
      %v306 = vsub.s32 2, %v305
      %v307 = vrot.slane %v294, %v306
      %v308 = vlaneseq
      %v309 = vshrl.u32 %v308, 7
      %v310 = vsub.s32 3, %v309
      %v311 = vrot.slane %v294, %v310
      %v316 = vmul.f32 %v292, %v299
      %v317 = vmul.f32 %v291, %v303
      %v318 = vmul.f32 %v290, %v307
      %v319 = vmul.f32 %v289, %v311
      %320 = vst [vmem:[#allocation2 + $0x20] sm:$0xf] %v316
      %321 = vst [vmem:[#allocation2 + $0x28] sm:$0xf] %v317
      %322 = vst [vmem:[#allocation2 + $0x30] sm:$0xf] %v318
      %323 = vst [vmem:[#allocation2 + $0x38] sm:$0xf] %v319
      %324 = vrot.lane.b32.xlu0 %v171, 65
      %v325 = vpop.permute.xlu0 %324
      %326 = vrot.lane.b32.xlu0 %v175, 65
      %v327 = vpop.permute.xlu0 %326
      %328 = vrot.lane.b32.xlu0 %v172, 65
      %v329 = vpop.permute.xlu0 %328
      %330 = vrot.lane.b32.xlu0 %v176, 65
      %v331 = vpop.permute.xlu0 %330
      %vm332 = vcmp.lt.s32.totalorder %v188, 65
      %v333 = vsel %vm332, %v329, %v331
      %v334 = vsel %vm332, %v327, %v329
      %v335 = vsel %vm332, %v325, %v327
      %v336 = vsel %vm332, %v331, %v325
      %s337 = scalar_lea.vmem %s1, 3
      %v338 = vld [vmem:[%s337] ss:$8 sm:$0xf]
      %v340 = vlaneseq
      %v341 = vshrl.u32 %v340, 7
      %v342 = vsub.s32 0, %v341
      %v343 = vrot.slane %v338, %v342
      %v344 = vlaneseq
      %v345 = vshrl.u32 %v344, 7
      %v346 = vsub.s32 1, %v345
      %v347 = vrot.slane %v338, %v346
      %v348 = vlaneseq
      %v349 = vshrl.u32 %v348, 7
      %v350 = vsub.s32 2, %v349
      %v351 = vrot.slane %v338, %v350
      %v352 = vlaneseq
      %v353 = vshrl.u32 %v352, 7
      %v354 = vsub.s32 3, %v353
      %v355 = vrot.slane %v338, %v354
      %v360 = vmul.f32 %v336, %v343
      %v361 = vmul.f32 %v335, %v347
      %v362 = vmul.f32 %v334, %v351
      %v363 = vmul.f32 %v333, %v355
      %v368 = vrot.slane %v360, 4
      %v369 = vrot.slane %v361, 4
      %v370 = vrot.slane %v362, 4
      %v371 = vrot.slane %v363, 4
      %376 = vst [vmem:[#allocation2 + $0x20] sm:$0xf0] %v368
      %377 = vst [vmem:[#allocation2 + $0x28] sm:$0xf0] %v369
      %378 = vst [vmem:[#allocation2 + $0x30] sm:$0xf0] %v370
      %379 = vst [vmem:[#allocation2 + $0x38] sm:$0xf0] %v371
      %380 = vrot.lane.b32.xlu0 %v171, 64
      %v381 = vpop.permute.xlu0 %380
      %382 = vrot.lane.b32.xlu0 %v175, 64
      %v383 = vpop.permute.xlu0 %382
      %384 = vrot.lane.b32.xlu0 %v172, 64
      %v385 = vpop.permute.xlu0 %384
      %386 = vrot.lane.b32.xlu0 %v176, 64
      %v387 = vpop.permute.xlu0 %386
      %vm388 = vcmp.lt.s32.totalorder %v188, 64
      %v389 = vsel %vm388, %v385, %v387
      %v390 = vsel %vm388, %v383, %v385
      %v391 = vsel %vm388, %v381, %v383
      %v392 = vsel %vm388, %v387, %v381
      %s393 = scalar_lea.vmem %s1, 4
      %v394 = vld [vmem:[%s393] ss:$8 sm:$0xf]
      %v396 = vlaneseq
      %v397 = vshrl.u32 %v396, 7
      %v398 = vsub.s32 0, %v397
      %v399 = vrot.slane %v394, %v398
      %v400 = vlaneseq
      %v401 = vshrl.u32 %v400, 7
      %v402 = vsub.s32 1, %v401
      %v403 = vrot.slane %v394, %v402
      %v404 = vlaneseq
      %v405 = vshrl.u32 %v404, 7
      %v406 = vsub.s32 2, %v405
      %v407 = vrot.slane %v394, %v406
      %v408 = vlaneseq
      %v409 = vshrl.u32 %v408, 7
      %v410 = vsub.s32 3, %v409
      %v411 = vrot.slane %v394, %v410
      %v416 = vmul.f32 %v392, %v399
      %v417 = vmul.f32 %v391, %v403
      %v418 = vmul.f32 %v390, %v407
      %v419 = vmul.f32 %v389, %v411
      %420 = vst [vmem:[#allocation2 + $0x40] sm:$0xf] %v416
      %421 = vst [vmem:[#allocation2 + $0x48] sm:$0xf] %v417
      %422 = vst [vmem:[#allocation2 + $0x50] sm:$0xf] %v418
      %423 = vst [vmem:[#allocation2 + $0x58] sm:$0xf] %v419
      %424 = vrot.lane.b32.xlu0 %v171, 63
      %v425 = vpop.permute.xlu0 %424
      %426 = vrot.lane.b32.xlu0 %v175, 63
      %v427 = vpop.permute.xlu0 %426
      %428 = vrot.lane.b32.xlu0 %v172, 63
      %v429 = vpop.permute.xlu0 %428
      %430 = vrot.lane.b32.xlu0 %v176, 63
      %v431 = vpop.permute.xlu0 %430
      %vm432 = vcmp.lt.s32.totalorder %v188, 63
      %v433 = vsel %vm432, %v429, %v431
      %v434 = vsel %vm432, %v427, %v429
      %v435 = vsel %vm432, %v425, %v427
      %v436 = vsel %vm432, %v431, %v425
      %s437 = scalar_lea.vmem %s1, 5
      %v438 = vld [vmem:[%s437] ss:$8 sm:$0xf]
      %v440 = vlaneseq
      %v441 = vshrl.u32 %v440, 7
      %v442 = vsub.s32 0, %v441
      %v443 = vrot.slane %v438, %v442
      %v444 = vlaneseq
      %v445 = vshrl.u32 %v444, 7
      %v446 = vsub.s32 1, %v445
      %v447 = vrot.slane %v438, %v446
      %v448 = vlaneseq
      %v449 = vshrl.u32 %v448, 7
      %v450 = vsub.s32 2, %v449
      %v451 = vrot.slane %v438, %v450
      %v452 = vlaneseq
      %v453 = vshrl.u32 %v452, 7
      %v454 = vsub.s32 3, %v453
      %v455 = vrot.slane %v438, %v454
      %v460 = vmul.f32 %v436, %v443
      %v461 = vmul.f32 %v435, %v447
      %v462 = vmul.f32 %v434, %v451
      %v463 = vmul.f32 %v433, %v455
      %v468 = vrot.slane %v460, 4
      %v469 = vrot.slane %v461, 4
      %v470 = vrot.slane %v462, 4
      %v471 = vrot.slane %v463, 4
      %476 = vst [vmem:[#allocation2 + $0x40] sm:$0xf0] %v468
      %477 = vst [vmem:[#allocation2 + $0x48] sm:$0xf0] %v469
      %478 = vst [vmem:[#allocation2 + $0x50] sm:$0xf0] %v470
      %479 = vst [vmem:[#allocation2 + $0x58] sm:$0xf0] %v471
      %480 = vrot.lane.b32.xlu0 %v171, 57
      %v481 = vpop.permute.xlu0 %480
      %482 = vrot.lane.b32.xlu0 %v175, 57
      %v483 = vpop.permute.xlu0 %482
      %484 = vrot.lane.b32.xlu0 %v172, 57
      %v485 = vpop.permute.xlu0 %484
      %486 = vrot.lane.b32.xlu0 %v176, 57
      %v487 = vpop.permute.xlu0 %486
      %vm488 = vcmp.lt.s32.totalorder %v188, 57
      %v489 = vsel %vm488, %v485, %v487
      %v490 = vsel %vm488, %v483, %v485
      %v491 = vsel %vm488, %v481, %v483
      %v492 = vsel %vm488, %v487, %v481
      %s493 = scalar_lea.vmem %s1, 6
      %v494 = vld [vmem:[%s493] ss:$8 sm:$0xf]
      %v496 = vlaneseq
      %v497 = vshrl.u32 %v496, 7
      %v498 = vsub.s32 0, %v497
      %v499 = vrot.slane %v494, %v498
      %v500 = vlaneseq
      %v501 = vshrl.u32 %v500, 7
      %v502 = vsub.s32 1, %v501
      %v503 = vrot.slane %v494, %v502
      %v504 = vlaneseq
      %v505 = vshrl.u32 %v504, 7
      %v506 = vsub.s32 2, %v505
      %v507 = vrot.slane %v494, %v506
      %v508 = vlaneseq
      %v509 = vshrl.u32 %v508, 7
      %v510 = vsub.s32 3, %v509
      %v511 = vrot.slane %v494, %v510
      %v516 = vmul.f32 %v492, %v499
      %v517 = vmul.f32 %v491, %v503
      %v518 = vmul.f32 %v490, %v507
      %v519 = vmul.f32 %v489, %v511
      %520 = vst [vmem:[#allocation2 + $0x60] sm:$0xf] %v516
      %521 = vst [vmem:[#allocation2 + $0x68] sm:$0xf] %v517
      %522 = vst [vmem:[#allocation2 + $0x70] sm:$0xf] %v518
      %523 = vst [vmem:[#allocation2 + $0x78] sm:$0xf] %v519
      %524 = vrot.lane.b32.xlu0 %v171, 56
      %v525 = vpop.permute.xlu0 %524
      %526 = vrot.lane.b32.xlu0 %v175, 56
      %v527 = vpop.permute.xlu0 %526
      %528 = vrot.lane.b32.xlu0 %v172, 56
      %v529 = vpop.permute.xlu0 %528
      %530 = vrot.lane.b32.xlu0 %v176, 56
      %v531 = vpop.permute.xlu0 %530
      %vm532 = vcmp.lt.s32.totalorder %v188, 56
      %v533 = vsel %vm532, %v529, %v531
      %v534 = vsel %vm532, %v527, %v529
      %v535 = vsel %vm532, %v525, %v527
      %v536 = vsel %vm532, %v531, %v525
      %s537 = scalar_lea.vmem %s1, 7
      %v538 = vld [vmem:[%s537] ss:$8 sm:$0xf]
      %v540 = vlaneseq
      %v541 = vshrl.u32 %v540, 7
      %v542 = vsub.s32 0, %v541
      %v543 = vrot.slane %v538, %v542
      %v544 = vlaneseq
      %v545 = vshrl.u32 %v544, 7
      %v546 = vsub.s32 1, %v545
      %v547 = vrot.slane %v538, %v546
      %v548 = vlaneseq
      %v549 = vshrl.u32 %v548, 7
      %v550 = vsub.s32 2, %v549
      %v551 = vrot.slane %v538, %v550
      %v552 = vlaneseq
      %v553 = vshrl.u32 %v552, 7
      %v554 = vsub.s32 3, %v553
      %v555 = vrot.slane %v538, %v554
      %v560 = vmul.f32 %v536, %v543
      %v561 = vmul.f32 %v535, %v547
      %v562 = vmul.f32 %v534, %v551
      %v563 = vmul.f32 %v533, %v555
      %v568 = vrot.slane %v560, 4
      %v569 = vrot.slane %v561, 4
      %v570 = vrot.slane %v562, 4
      %v571 = vrot.slane %v563, 4
      %576 = vst [vmem:[#allocation2 + $0x60] sm:$0xf0] %v568
      %577 = vst [vmem:[#allocation2 + $0x68] sm:$0xf0] %v569
      %578 = vst [vmem:[#allocation2 + $0x70] sm:$0xf0] %v570
      %579 = vst [vmem:[#allocation2 + $0x78] sm:$0xf0] %v571
      %580 = vrot.lane.b32.xlu0 %v171, 55
      %v581 = vpop.permute.xlu0 %580
      %582 = vrot.lane.b32.xlu0 %v175, 55
      %v583 = vpop.permute.xlu0 %582
      %584 = vrot.lane.b32.xlu0 %v172, 55
      %v585 = vpop.permute.xlu0 %584
      %586 = vrot.lane.b32.xlu0 %v176, 55
      %v587 = vpop.permute.xlu0 %586
      %vm588 = vcmp.lt.s32.totalorder %v188, 55
      %v589 = vsel %vm588, %v585, %v587
      %v590 = vsel %vm588, %v583, %v585
      %v591 = vsel %vm588, %v581, %v583
      %v592 = vsel %vm588, %v587, %v581
      %s593 = scalar_lea.vmem %s1, 32
      %v594 = vld [vmem:[%s593] ss:$8 sm:$0xf]
      %v596 = vlaneseq
      %v597 = vshrl.u32 %v596, 7
      %v598 = vsub.s32 0, %v597
      %v599 = vrot.slane %v594, %v598
      %v600 = vlaneseq
      %v601 = vshrl.u32 %v600, 7
      %v602 = vsub.s32 1, %v601
      %v603 = vrot.slane %v594, %v602
      %v604 = vlaneseq
      %v605 = vshrl.u32 %v604, 7
      %v606 = vsub.s32 2, %v605
      %v607 = vrot.slane %v594, %v606
      %v608 = vlaneseq
      %v609 = vshrl.u32 %v608, 7
      %v610 = vsub.s32 3, %v609
      %v611 = vrot.slane %v594, %v610
      %v616 = vmul.f32 %v592, %v599
      %v617 = vmul.f32 %v591, %v603
      %v618 = vmul.f32 %v590, %v607
      %v619 = vmul.f32 %v589, %v611
      %620 = vst [vmem:[#allocation2 + $0x80] sm:$0xf] %v616
      %621 = vst [vmem:[#allocation2 + $0x88] sm:$0xf] %v617
      %622 = vst [vmem:[#allocation2 + $0x90] sm:$0xf] %v618
      %623 = vst [vmem:[#allocation2 + $0x98] sm:$0xf] %v619
      %624 = vrot.lane.b32.xlu0 %v171, 9
      %v625 = vpop.permute.xlu0 %624
      %626 = vrot.lane.b32.xlu0 %v175, 9
      %v627 = vpop.permute.xlu0 %626
      %628 = vrot.lane.b32.xlu0 %v172, 9
      %v629 = vpop.permute.xlu0 %628
      %630 = vrot.lane.b32.xlu0 %v176, 9
      %v631 = vpop.permute.xlu0 %630
      %vm632 = vcmp.lt.s32.totalorder %v188, 9
      %v633 = vsel %vm632, %v629, %v631
      %v634 = vsel %vm632, %v627, %v629
      %v635 = vsel %vm632, %v625, %v627
      %v636 = vsel %vm632, %v631, %v625
      %s637 = scalar_lea.vmem %s1, 33
      %v638 = vld [vmem:[%s637] ss:$8 sm:$0xf]
      %v640 = vlaneseq
      %v641 = vshrl.u32 %v640, 7
      %v642 = vsub.s32 0, %v641
      %v643 = vrot.slane %v638, %v642
      %v644 = vlaneseq
      %v645 = vshrl.u32 %v644, 7
      %v646 = vsub.s32 1, %v645
      %v647 = vrot.slane %v638, %v646
      %v648 = vlaneseq
      %v649 = vshrl.u32 %v648, 7
      %v650 = vsub.s32 2, %v649
      %v651 = vrot.slane %v638, %v650
      %v652 = vlaneseq
      %v653 = vshrl.u32 %v652, 7
      %v654 = vsub.s32 3, %v653
      %v655 = vrot.slane %v638, %v654
      %v660 = vmul.f32 %v636, %v643
      %v661 = vmul.f32 %v635, %v647
      %v662 = vmul.f32 %v634, %v651
      %v663 = vmul.f32 %v633, %v655
      %v668 = vrot.slane %v660, 4
      %v669 = vrot.slane %v661, 4
      %v670 = vrot.slane %v662, 4
      %v671 = vrot.slane %v663, 4
      %676 = vst [vmem:[#allocation2 + $0x80] sm:$0xf0] %v668
      %677 = vst [vmem:[#allocation2 + $0x88] sm:$0xf0] %v669
      %678 = vst [vmem:[#allocation2 + $0x90] sm:$0xf0] %v670
      %679 = vst [vmem:[#allocation2 + $0x98] sm:$0xf0] %v671
      %680 = vrot.lane.b32.xlu0 %v171, 8
      %v681 = vpop.permute.xlu0 %680
      %682 = vrot.lane.b32.xlu0 %v175, 8
      %v683 = vpop.permute.xlu0 %682
      %684 = vrot.lane.b32.xlu0 %v172, 8
      %v685 = vpop.permute.xlu0 %684
      %686 = vrot.lane.b32.xlu0 %v176, 8
      %v687 = vpop.permute.xlu0 %686
      %vm688 = vcmp.lt.s32.totalorder %v188, 8
      %v689 = vsel %vm688, %v685, %v687
      %v690 = vsel %vm688, %v683, %v685
      %v691 = vsel %vm688, %v681, %v683
      %v692 = vsel %vm688, %v687, %v681
      %s693 = scalar_lea.vmem %s1, 34
      %v694 = vld [vmem:[%s693] ss:$8 sm:$0xf]
      %v696 = vlaneseq
      %v697 = vshrl.u32 %v696, 7
      %v698 = vsub.s32 0, %v697
      %v699 = vrot.slane %v694, %v698
      %v700 = vlaneseq
      %v701 = vshrl.u32 %v700, 7
      %v702 = vsub.s32 1, %v701
      %v703 = vrot.slane %v694, %v702
      %v704 = vlaneseq
      %v705 = vshrl.u32 %v704, 7
      %v706 = vsub.s32 2, %v705
      %v707 = vrot.slane %v694, %v706
      %v708 = vlaneseq
      %v709 = vshrl.u32 %v708, 7
      %v710 = vsub.s32 3, %v709
      %v711 = vrot.slane %v694, %v710
      %v716 = vmul.f32 %v692, %v699
      %v717 = vmul.f32 %v691, %v703
      %v718 = vmul.f32 %v690, %v707
      %v719 = vmul.f32 %v689, %v711
      %720 = vst [vmem:[#allocation2 + $0xa0] sm:$0xf] %v716
      %721 = vst [vmem:[#allocation2 + $0xa8] sm:$0xf] %v717
      %722 = vst [vmem:[#allocation2 + $0xb0] sm:$0xf] %v718
      %723 = vst [vmem:[#allocation2 + $0xb8] sm:$0xf] %v719
      %724 = vrot.lane.b32.xlu0 %v171, 7
      %v725 = vpop.permute.xlu0 %724
      %726 = vrot.lane.b32.xlu0 %v175, 7
      %v727 = vpop.permute.xlu0 %726
      %728 = vrot.lane.b32.xlu0 %v172, 7
      %v729 = vpop.permute.xlu0 %728
      %730 = vrot.lane.b32.xlu0 %v176, 7
      %v731 = vpop.permute.xlu0 %730
      %vm732 = vcmp.lt.s32.totalorder %v188, 7
      %v733 = vsel %vm732, %v729, %v731
      %v734 = vsel %vm732, %v727, %v729
      %v735 = vsel %vm732, %v725, %v727
      %v736 = vsel %vm732, %v731, %v725
      %s737 = scalar_lea.vmem %s1, 35
      %v738 = vld [vmem:[%s737] ss:$8 sm:$0xf]
      %v740 = vlaneseq
      %v741 = vshrl.u32 %v740, 7
      %v742 = vsub.s32 0, %v741
      %v743 = vrot.slane %v738, %v742
      %v744 = vlaneseq
      %v745 = vshrl.u32 %v744, 7
      %v746 = vsub.s32 1, %v745
      %v747 = vrot.slane %v738, %v746
      %v748 = vlaneseq
      %v749 = vshrl.u32 %v748, 7
      %v750 = vsub.s32 2, %v749
      %v751 = vrot.slane %v738, %v750
      %v752 = vlaneseq
      %v753 = vshrl.u32 %v752, 7
      %v754 = vsub.s32 3, %v753
      %v755 = vrot.slane %v738, %v754
      %v760 = vmul.f32 %v736, %v743
      %v761 = vmul.f32 %v735, %v747
      %v762 = vmul.f32 %v734, %v751
      %v763 = vmul.f32 %v733, %v755
      %v768 = vrot.slane %v760, 4
      %v769 = vrot.slane %v761, 4
      %v770 = vrot.slane %v762, 4
      %v771 = vrot.slane %v763, 4
      %776 = vst [vmem:[#allocation2 + $0xa0] sm:$0xf0] %v768
      %777 = vst [vmem:[#allocation2 + $0xa8] sm:$0xf0] %v769
      %778 = vst [vmem:[#allocation2 + $0xb0] sm:$0xf0] %v770
      %779 = vst [vmem:[#allocation2 + $0xb8] sm:$0xf0] %v771
      %780 = vrot.lane.b32.xlu0 %v171, 1
      %v781 = vpop.permute.xlu0 %780
      %782 = vrot.lane.b32.xlu0 %v175, 1
      %v783 = vpop.permute.xlu0 %782
      %784 = vrot.lane.b32.xlu0 %v172, 1
      %v785 = vpop.permute.xlu0 %784
      %786 = vrot.lane.b32.xlu0 %v176, 1
      %v787 = vpop.permute.xlu0 %786
      %vm788 = vcmp.lt.s32.totalorder %v188, 1
      %v789 = vsel %vm788, %v785, %v787
      %v790 = vsel %vm788, %v783, %v785
      %v791 = vsel %vm788, %v781, %v783
      %v792 = vsel %vm788, %v787, %v781
      %s793 = scalar_lea.vmem %s1, 36
      %v794 = vld [vmem:[%s793] ss:$8 sm:$0xf]
      %v796 = vlaneseq
      %v797 = vshrl.u32 %v796, 7
      %v798 = vsub.s32 0, %v797
      %v799 = vrot.slane %v794, %v798
      %v800 = vlaneseq
      %v801 = vshrl.u32 %v800, 7
      %v802 = vsub.s32 1, %v801
      %v803 = vrot.slane %v794, %v802
      %v804 = vlaneseq
      %v805 = vshrl.u32 %v804, 7
      %v806 = vsub.s32 2, %v805
      %v807 = vrot.slane %v794, %v806
      %v808 = vlaneseq
      %v809 = vshrl.u32 %v808, 7
      %v810 = vsub.s32 3, %v809
      %v811 = vrot.slane %v794, %v810
      %v816 = vmul.f32 %v792, %v799
      %v817 = vmul.f32 %v791, %v803
      %v818 = vmul.f32 %v790, %v807
      %v819 = vmul.f32 %v789, %v811
      %820 = vst [vmem:[#allocation2 + $0xc0] sm:$0xf] %v816
      %821 = vst [vmem:[#allocation2 + $0xc8] sm:$0xf] %v817
      %822 = vst [vmem:[#allocation2 + $0xd0] sm:$0xf] %v818
      %823 = vst [vmem:[#allocation2 + $0xd8] sm:$0xf] %v819
      %v824 = vcombine.low %v171, %v171
      %v825 = vcombine.low %v172, %v172
      %828 = vst [vmem:[#allocation2 + $0xc0] sm:$0xf0] %v824
      %829 = vst [vmem:[#allocation2 + $0xc8] sm:$0xf0] %v171
      %830 = vst [vmem:[#allocation2 + $0xd0] sm:$0xf0] %v825
      %831 = vst [vmem:[#allocation2 + $0xd8] sm:$0xf0] %v172
      %832 = vrot.lane.b32.xlu0 %v171, 127
      %v833 = vpop.permute.xlu0 %832
      %834 = vrot.lane.b32.xlu0 %v175, 127
      %v835 = vpop.permute.xlu0 %834
      %836 = vrot.lane.b32.xlu0 %v172, 127
      %v837 = vpop.permute.xlu0 %836
      %838 = vrot.lane.b32.xlu0 %v176, 127
      %v839 = vpop.permute.xlu0 %838
      %vm840 = vcmp.lt.s32.totalorder %v188, 127
      %v841 = vsel %vm840, %v837, %v839
      %v842 = vsel %vm840, %v835, %v837
      %v843 = vsel %vm840, %v833, %v835
      %v844 = vsel %vm840, %v839, %v833
      %s845 = scalar_lea.vmem %s1, 38
      %v846 = vld [vmem:[%s845] ss:$8 sm:$0xf]
      %v848 = vlaneseq
      %v849 = vshrl.u32 %v848, 7
      %v850 = vsub.s32 0, %v849
      %v851 = vrot.slane %v846, %v850
      %v852 = vlaneseq
      %v853 = vshrl.u32 %v852, 7
      %v854 = vsub.s32 1, %v853
      %v855 = vrot.slane %v846, %v854
      %v856 = vlaneseq
      %v857 = vshrl.u32 %v856, 7
      %v858 = vsub.s32 2, %v857
      %v859 = vrot.slane %v846, %v858
      %v860 = vlaneseq
      %v861 = vshrl.u32 %v860, 7
      %v862 = vsub.s32 3, %v861
      %v863 = vrot.slane %v846, %v862
      %v868 = vmul.f32 %v843, %v851
      %v869 = vmul.f32 %v842, %v855
      %v870 = vmul.f32 %v841, %v859
      %v871 = vmul.f32 %v844, %v863
      %872 = vst [vmem:[#allocation2 + $0xe0] sm:$0xf] %v868
      %873 = vst [vmem:[#allocation2 + $0xe8] sm:$0xf] %v869
      %874 = vst [vmem:[#allocation2 + $0xf0] sm:$0xf] %v870
      %875 = vst [vmem:[#allocation2 + $0xf8] sm:$0xf] %v871
      %876 = vrot.lane.b32.xlu0 %v171, 121
      %v877 = vpop.permute.xlu0 %876
      %878 = vrot.lane.b32.xlu0 %v175, 121
      %v879 = vpop.permute.xlu0 %878
      %880 = vrot.lane.b32.xlu0 %v172, 121
      %v881 = vpop.permute.xlu0 %880
      %882 = vrot.lane.b32.xlu0 %v176, 121
      %v883 = vpop.permute.xlu0 %882
      %vm884 = vcmp.lt.s32.totalorder %v188, 121
      %v885 = vsel %vm884, %v881, %v883
      %v886 = vsel %vm884, %v879, %v881
      %v887 = vsel %vm884, %v877, %v879
      %v888 = vsel %vm884, %v883, %v877
      %s889 = scalar_lea.vmem %s1, 39
      %v890 = vld [vmem:[%s889] ss:$8 sm:$0xf]
      %v892 = vlaneseq
      %v893 = vshrl.u32 %v892, 7
      %v894 = vsub.s32 0, %v893
      %v895 = vrot.slane %v890, %v894
      %v896 = vlaneseq
      %v897 = vshrl.u32 %v896, 7
      %v898 = vsub.s32 1, %v897
      %v899 = vrot.slane %v890, %v898
      %v900 = vlaneseq
      %v901 = vshrl.u32 %v900, 7
      %v902 = vsub.s32 2, %v901
      %v903 = vrot.slane %v890, %v902
      %v904 = vlaneseq
      %v905 = vshrl.u32 %v904, 7
      %v906 = vsub.s32 3, %v905
      %v907 = vrot.slane %v890, %v906
      %v912 = vmul.f32 %v887, %v895
      %v913 = vmul.f32 %v886, %v899
      %v914 = vmul.f32 %v885, %v903
      %v915 = vmul.f32 %v888, %v907
      %v920 = vrot.slane %v912, 4
      %v921 = vrot.slane %v913, 4
      %v922 = vrot.slane %v914, 4
      %v923 = vrot.slane %v915, 4
      %928 = vst [vmem:[#allocation2 + $0xe0] sm:$0xf0] %v920
      %929 = vst [vmem:[#allocation2 + $0xe8] sm:$0xf0] %v921
      %930 = vst [vmem:[#allocation2 + $0xf0] sm:$0xf0] %v922
      %931 = vst [vmem:[#allocation2 + $0xf8] sm:$0xf0] %v923
      %932 = vrot.lane.b32.xlu0 %v171, 120
      %v933 = vpop.permute.xlu0 %932
      %934 = vrot.lane.b32.xlu0 %v175, 120
      %v935 = vpop.permute.xlu0 %934
      %936 = vrot.lane.b32.xlu0 %v172, 120
      %v937 = vpop.permute.xlu0 %936
      %938 = vrot.lane.b32.xlu0 %v176, 120
      %v939 = vpop.permute.xlu0 %938
      %vm940 = vcmp.lt.s32.totalorder %v188, 120
      %v941 = vsel %vm940, %v937, %v939
      %v942 = vsel %vm940, %v935, %v937
      %v943 = vsel %vm940, %v933, %v935
      %v944 = vsel %vm940, %v939, %v933
      %s945 = scalar_lea.vmem %s1, 64
      %v946 = vld [vmem:[%s945] ss:$8 sm:$0xf]
      %v948 = vlaneseq
      %v949 = vshrl.u32 %v948, 7
      %v950 = vsub.s32 0, %v949
      %v951 = vrot.slane %v946, %v950
      %v952 = vlaneseq
      %v953 = vshrl.u32 %v952, 7
      %v954 = vsub.s32 1, %v953
      %v955 = vrot.slane %v946, %v954
      %v956 = vlaneseq
      %v957 = vshrl.u32 %v956, 7
      %v958 = vsub.s32 2, %v957
      %v959 = vrot.slane %v946, %v958
      %v960 = vlaneseq
      %v961 = vshrl.u32 %v960, 7
      %v962 = vsub.s32 3, %v961
      %v963 = vrot.slane %v946, %v962
      %v968 = vmul.f32 %v943, %v951
      %v969 = vmul.f32 %v942, %v955
      %v970 = vmul.f32 %v941, %v959
      %v971 = vmul.f32 %v944, %v963
      %972 = vst [vmem:[#allocation2 + $0x100] sm:$0xf] %v968
      %973 = vst [vmem:[#allocation2 + $0x108] sm:$0xf] %v969
      %974 = vst [vmem:[#allocation2 + $0x110] sm:$0xf] %v970
      %975 = vst [vmem:[#allocation2 + $0x118] sm:$0xf] %v971
      %976 = vrot.lane.b32.xlu0 %v171, 119
      %v977 = vpop.permute.xlu0 %976
      %978 = vrot.lane.b32.xlu0 %v175, 119
      %v979 = vpop.permute.xlu0 %978
      %980 = vrot.lane.b32.xlu0 %v172, 119
      %v981 = vpop.permute.xlu0 %980
      %982 = vrot.lane.b32.xlu0 %v176, 119
      %v983 = vpop.permute.xlu0 %982
      %vm984 = vcmp.lt.s32.totalorder %v188, 119
      %v985 = vsel %vm984, %v981, %v983
      %v986 = vsel %vm984, %v979, %v981
      %v987 = vsel %vm984, %v977, %v979
      %v988 = vsel %vm984, %v983, %v977
      %s989 = scalar_lea.vmem %s1, 65
      %v990 = vld [vmem:[%s989] ss:$8 sm:$0xf]
      %v992 = vlaneseq
      %v993 = vshrl.u32 %v992, 7
      %v994 = vsub.s32 0, %v993
      %v995 = vrot.slane %v990, %v994
      %v996 = vlaneseq
      %v997 = vshrl.u32 %v996, 7
      %v998 = vsub.s32 1, %v997
      %v999 = vrot.slane %v990, %v998
      %v1000 = vlaneseq
      %v1001 = vshrl.u32 %v1000, 7
      %v1002 = vsub.s32 2, %v1001
      %v1003 = vrot.slane %v990, %v1002
      %v1004 = vlaneseq
      %v1005 = vshrl.u32 %v1004, 7
      %v1006 = vsub.s32 3, %v1005
      %v1007 = vrot.slane %v990, %v1006
      %v1012 = vmul.f32 %v987, %v995
      %v1013 = vmul.f32 %v986, %v999
      %v1014 = vmul.f32 %v985, %v1003
      %v1015 = vmul.f32 %v988, %v1007
      %v1020 = vrot.slane %v1012, 4
      %v1021 = vrot.slane %v1013, 4
      %v1022 = vrot.slane %v1014, 4
      %v1023 = vrot.slane %v1015, 4
      %1028 = vst [vmem:[#allocation2 + $0x100] sm:$0xf0] %v1020
      %1029 = vst [vmem:[#allocation2 + $0x108] sm:$0xf0] %v1021
      %1030 = vst [vmem:[#allocation2 + $0x110] sm:$0xf0] %v1022
      %1031 = vst [vmem:[#allocation2 + $0x118] sm:$0xf0] %v1023
      %s1032 = scalar_lea.vmem %s1, 66
      %v1033 = vld [vmem:[%s1032] ss:$8 sm:$0xf]
      %v1035 = vlaneseq
      %v1036 = vshrl.u32 %v1035, 7
      %v1037 = vsub.s32 0, %v1036
      %v1038 = vrot.slane %v1033, %v1037
      %v1039 = vlaneseq
      %v1040 = vshrl.u32 %v1039, 7
      %v1041 = vsub.s32 1, %v1040
      %v1042 = vrot.slane %v1033, %v1041
      %v1043 = vlaneseq
      %v1044 = vshrl.u32 %v1043, 7
      %v1045 = vsub.s32 2, %v1044
      %v1046 = vrot.slane %v1033, %v1045
      %v1047 = vlaneseq
      %v1048 = vshrl.u32 %v1047, 7
      %v1049 = vsub.s32 3, %v1048
      %v1050 = vrot.slane %v1033, %v1049
      %v1055 = vmul.f32 %v192, %v1038
      %v1056 = vmul.f32 %v191, %v1042
      %v1057 = vmul.f32 %v190, %v1046
      %v1058 = vmul.f32 %v193, %v1050
      %1059 = vst [vmem:[#allocation2 + $0x120] sm:$0xf] %v1055
      %1060 = vst [vmem:[#allocation2 + $0x128] sm:$0xf] %v1056
      %1061 = vst [vmem:[#allocation2 + $0x130] sm:$0xf] %v1057
      %1062 = vst [vmem:[#allocation2 + $0x138] sm:$0xf] %v1058
      %s1063 = scalar_lea.vmem %s1, 67
      %v1064 = vld [vmem:[%s1063] ss:$8 sm:$0xf]
      %v1066 = vlaneseq
      %v1067 = vshrl.u32 %v1066, 7
      %v1068 = vsub.s32 0, %v1067
      %v1069 = vrot.slane %v1064, %v1068
      %v1070 = vlaneseq
      %v1071 = vshrl.u32 %v1070, 7
      %v1072 = vsub.s32 1, %v1071
      %v1073 = vrot.slane %v1064, %v1072
      %v1074 = vlaneseq
      %v1075 = vshrl.u32 %v1074, 7
      %v1076 = vsub.s32 2, %v1075
      %v1077 = vrot.slane %v1064, %v1076
      %v1078 = vlaneseq
      %v1079 = vshrl.u32 %v1078, 7
      %v1080 = vsub.s32 3, %v1079
      %v1081 = vrot.slane %v1064, %v1080
      %v1086 = vmul.f32 %v235, %v1069
      %v1087 = vmul.f32 %v234, %v1073
      %v1088 = vmul.f32 %v233, %v1077
      %v1089 = vmul.f32 %v236, %v1081
      %v1094 = vrot.slane %v1086, 4
      %v1095 = vrot.slane %v1087, 4
      %v1096 = vrot.slane %v1088, 4
      %v1097 = vrot.slane %v1089, 4
      %1102 = vst [vmem:[#allocation2 + $0x120] sm:$0xf0] %v1094
      %1103 = vst [vmem:[#allocation2 + $0x128] sm:$0xf0] %v1095
      %1104 = vst [vmem:[#allocation2 + $0x130] sm:$0xf0] %v1096
      %1105 = vst [vmem:[#allocation2 + $0x138] sm:$0xf0] %v1097
      %s1106 = scalar_lea.vmem %s1, 68
      %v1107 = vld [vmem:[%s1106] ss:$8 sm:$0xf]
      %v1109 = vlaneseq
      %v1110 = vshrl.u32 %v1109, 7
      %v1111 = vsub.s32 0, %v1110
      %v1112 = vrot.slane %v1107, %v1111
      %v1113 = vlaneseq
      %v1114 = vshrl.u32 %v1113, 7
      %v1115 = vsub.s32 1, %v1114
      %v1116 = vrot.slane %v1107, %v1115
      %v1117 = vlaneseq
      %v1118 = vshrl.u32 %v1117, 7
      %v1119 = vsub.s32 2, %v1118
      %v1120 = vrot.slane %v1107, %v1119
      %v1121 = vlaneseq
      %v1122 = vshrl.u32 %v1121, 7
      %v1123 = vsub.s32 3, %v1122
      %v1124 = vrot.slane %v1107, %v1123
      %v1129 = vmul.f32 %v291, %v1112
      %v1130 = vmul.f32 %v290, %v1116
      %v1131 = vmul.f32 %v289, %v1120
      %v1132 = vmul.f32 %v292, %v1124
      %1133 = vst [vmem:[#allocation2 + $0x140] sm:$0xf] %v1129
      %1134 = vst [vmem:[#allocation2 + $0x148] sm:$0xf] %v1130
      %1135 = vst [vmem:[#allocation2 + $0x150] sm:$0xf] %v1131
      %1136 = vst [vmem:[#allocation2 + $0x158] sm:$0xf] %v1132
      %s1137 = scalar_lea.vmem %s1, 69
      %v1138 = vld [vmem:[%s1137] ss:$8 sm:$0xf]
      %v1140 = vlaneseq
      %v1141 = vshrl.u32 %v1140, 7
      %v1142 = vsub.s32 0, %v1141
      %v1143 = vrot.slane %v1138, %v1142
      %v1144 = vlaneseq
      %v1145 = vshrl.u32 %v1144, 7
      %v1146 = vsub.s32 1, %v1145
      %v1147 = vrot.slane %v1138, %v1146
      %v1148 = vlaneseq
      %v1149 = vshrl.u32 %v1148, 7
      %v1150 = vsub.s32 2, %v1149
      %v1151 = vrot.slane %v1138, %v1150
      %v1152 = vlaneseq
      %v1153 = vshrl.u32 %v1152, 7
      %v1154 = vsub.s32 3, %v1153
      %v1155 = vrot.slane %v1138, %v1154
      %v1160 = vmul.f32 %v335, %v1143
      %v1161 = vmul.f32 %v334, %v1147
      %v1162 = vmul.f32 %v333, %v1151
      %v1163 = vmul.f32 %v336, %v1155
      %v1168 = vrot.slane %v1160, 4
      %v1169 = vrot.slane %v1161, 4
      %v1170 = vrot.slane %v1162, 4
      %v1171 = vrot.slane %v1163, 4
      %1176 = vst [vmem:[#allocation2 + $0x140] sm:$0xf0] %v1168
      %1177 = vst [vmem:[#allocation2 + $0x148] sm:$0xf0] %v1169
      %1178 = vst [vmem:[#allocation2 + $0x150] sm:$0xf0] %v1170
      %1179 = vst [vmem:[#allocation2 + $0x158] sm:$0xf0] %v1171
      %s1180 = scalar_lea.vmem %s1, 70
      %v1181 = vld [vmem:[%s1180] ss:$8 sm:$0xf]
      %v1183 = vlaneseq
      %v1184 = vshrl.u32 %v1183, 7
      %v1185 = vsub.s32 0, %v1184
      %v1186 = vrot.slane %v1181, %v1185
      %v1187 = vlaneseq
      %v1188 = vshrl.u32 %v1187, 7
      %v1189 = vsub.s32 1, %v1188
      %v1190 = vrot.slane %v1181, %v1189
      %v1191 = vlaneseq
      %v1192 = vshrl.u32 %v1191, 7
      %v1193 = vsub.s32 2, %v1192
      %v1194 = vrot.slane %v1181, %v1193
      %v1195 = vlaneseq
      %v1196 = vshrl.u32 %v1195, 7
      %v1197 = vsub.s32 3, %v1196
      %v1198 = vrot.slane %v1181, %v1197
      %v1203 = vmul.f32 %v391, %v1186
      %v1204 = vmul.f32 %v390, %v1190
      %v1205 = vmul.f32 %v389, %v1194
      %v1206 = vmul.f32 %v392, %v1198
      %1207 = vst [vmem:[#allocation2 + $0x160] sm:$0xf] %v1203
      %1208 = vst [vmem:[#allocation2 + $0x168] sm:$0xf] %v1204
      %1209 = vst [vmem:[#allocation2 + $0x170] sm:$0xf] %v1205
      %1210 = vst [vmem:[#allocation2 + $0x178] sm:$0xf] %v1206
      %s1211 = scalar_lea.vmem %s1, 71
      %v1212 = vld [vmem:[%s1211] ss:$8 sm:$0xf]
      %v1214 = vlaneseq
      %v1215 = vshrl.u32 %v1214, 7
      %v1216 = vsub.s32 0, %v1215
      %v1217 = vrot.slane %v1212, %v1216
      %v1218 = vlaneseq
      %v1219 = vshrl.u32 %v1218, 7
      %v1220 = vsub.s32 1, %v1219
      %v1221 = vrot.slane %v1212, %v1220
      %v1222 = vlaneseq
      %v1223 = vshrl.u32 %v1222, 7
      %v1224 = vsub.s32 2, %v1223
      %v1225 = vrot.slane %v1212, %v1224
      %v1226 = vlaneseq
      %v1227 = vshrl.u32 %v1226, 7
      %v1228 = vsub.s32 3, %v1227
      %v1229 = vrot.slane %v1212, %v1228
      %v1234 = vmul.f32 %v435, %v1217
      %v1235 = vmul.f32 %v434, %v1221
      %v1236 = vmul.f32 %v433, %v1225
      %v1237 = vmul.f32 %v436, %v1229
      %v1242 = vrot.slane %v1234, 4
      %v1243 = vrot.slane %v1235, 4
      %v1244 = vrot.slane %v1236, 4
      %v1245 = vrot.slane %v1237, 4
      %1250 = vst [vmem:[#allocation2 + $0x160] sm:$0xf0] %v1242
      %1251 = vst [vmem:[#allocation2 + $0x168] sm:$0xf0] %v1243
      %1252 = vst [vmem:[#allocation2 + $0x170] sm:$0xf0] %v1244
      %1253 = vst [vmem:[#allocation2 + $0x178] sm:$0xf0] %v1245
      %s1254 = scalar_lea.vmem %s1, 96
      %v1255 = vld [vmem:[%s1254] ss:$8 sm:$0xf]
      %v1257 = vlaneseq
      %v1258 = vshrl.u32 %v1257, 7
      %v1259 = vsub.s32 0, %v1258
      %v1260 = vrot.slane %v1255, %v1259
      %v1261 = vlaneseq
      %v1262 = vshrl.u32 %v1261, 7
      %v1263 = vsub.s32 1, %v1262
      %v1264 = vrot.slane %v1255, %v1263
      %v1265 = vlaneseq
      %v1266 = vshrl.u32 %v1265, 7
      %v1267 = vsub.s32 2, %v1266
      %v1268 = vrot.slane %v1255, %v1267
      %v1269 = vlaneseq
      %v1270 = vshrl.u32 %v1269, 7
      %v1271 = vsub.s32 3, %v1270
      %v1272 = vrot.slane %v1255, %v1271
      %v1277 = vmul.f32 %v491, %v1260
      %v1278 = vmul.f32 %v490, %v1264
      %v1279 = vmul.f32 %v489, %v1268
      %v1280 = vmul.f32 %v492, %v1272
      %1281 = vst [vmem:[#allocation2 + $0x180] sm:$0xf] %v1277
      %1282 = vst [vmem:[#allocation2 + $0x188] sm:$0xf] %v1278
      %1283 = vst [vmem:[#allocation2 + $0x190] sm:$0xf] %v1279
      %1284 = vst [vmem:[#allocation2 + $0x198] sm:$0xf] %v1280
      %s1285 = scalar_lea.vmem %s1, 97
      %v1286 = vld [vmem:[%s1285] ss:$8 sm:$0xf]
      %v1288 = vlaneseq
      %v1289 = vshrl.u32 %v1288, 7
      %v1290 = vsub.s32 0, %v1289
      %v1291 = vrot.slane %v1286, %v1290
      %v1292 = vlaneseq
      %v1293 = vshrl.u32 %v1292, 7
      %v1294 = vsub.s32 1, %v1293
      %v1295 = vrot.slane %v1286, %v1294
      %v1296 = vlaneseq
      %v1297 = vshrl.u32 %v1296, 7
      %v1298 = vsub.s32 2, %v1297
      %v1299 = vrot.slane %v1286, %v1298
      %v1300 = vlaneseq
      %v1301 = vshrl.u32 %v1300, 7
      %v1302 = vsub.s32 3, %v1301
      %v1303 = vrot.slane %v1286, %v1302
      %v1308 = vmul.f32 %v535, %v1291
      %v1309 = vmul.f32 %v534, %v1295
      %v1310 = vmul.f32 %v533, %v1299
      %v1311 = vmul.f32 %v536, %v1303
      %v1316 = vrot.slane %v1308, 4
      %v1317 = vrot.slane %v1309, 4
      %v1318 = vrot.slane %v1310, 4
      %v1319 = vrot.slane %v1311, 4
      %1324 = vst [vmem:[#allocation2 + $0x180] sm:$0xf0] %v1316
      %1325 = vst [vmem:[#allocation2 + $0x188] sm:$0xf0] %v1317
      %1326 = vst [vmem:[#allocation2 + $0x190] sm:$0xf0] %v1318
      %1327 = vst [vmem:[#allocation2 + $0x198] sm:$0xf0] %v1319
      %s1328 = scalar_lea.vmem %s1, 98
      %v1329 = vld [vmem:[%s1328] ss:$8 sm:$0xf]
      %v1331 = vlaneseq
      %v1332 = vshrl.u32 %v1331, 7
      %v1333 = vsub.s32 0, %v1332
      %v1334 = vrot.slane %v1329, %v1333
      %v1335 = vlaneseq
      %v1336 = vshrl.u32 %v1335, 7
      %v1337 = vsub.s32 1, %v1336
      %v1338 = vrot.slane %v1329, %v1337
      %v1339 = vlaneseq
      %v1340 = vshrl.u32 %v1339, 7
      %v1341 = vsub.s32 2, %v1340
      %v1342 = vrot.slane %v1329, %v1341
      %v1343 = vlaneseq
      %v1344 = vshrl.u32 %v1343, 7
      %v1345 = vsub.s32 3, %v1344
      %v1346 = vrot.slane %v1329, %v1345
      %v1351 = vmul.f32 %v591, %v1334
      %v1352 = vmul.f32 %v590, %v1338
      %v1353 = vmul.f32 %v589, %v1342
      %v1354 = vmul.f32 %v592, %v1346
      %1355 = vst [vmem:[#allocation2 + $0x1a0] sm:$0xf] %v1351
      %1356 = vst [vmem:[#allocation2 + $0x1a8] sm:$0xf] %v1352
      %1357 = vst [vmem:[#allocation2 + $0x1b0] sm:$0xf] %v1353
      %1358 = vst [vmem:[#allocation2 + $0x1b8] sm:$0xf] %v1354
      %1359 = vst [vmem:[#allocation2 + $0x1a0] sm:$0xf0] 0.0
      %1360 = vst [vmem:[#allocation2 + $0x1a8] sm:$0xf0] 0.0
      %1361 = vst [vmem:[#allocation2 + $0x1b0] sm:$0xf0] 0.0
      %1362 = vst [vmem:[#allocation2 + $0x1b8] sm:$0xf0] 0.0
      %1363 = vst [vmem:[#allocation2 + $0x1c0] sm:$0xff] 0.0
      %1364 = vst [vmem:[#allocation2 + $0x1c8] sm:$0xff] 0.0
      %1365 = vst [vmem:[#allocation2 + $0x1d0] sm:$0xff] 0.0
      %1366 = vst [vmem:[#allocation2 + $0x1d8] sm:$0xff] 0.0
      %1367 = vst [vmem:[#allocation2 + $0x1e0] sm:$0xff] 0.0
      %1368 = vst [vmem:[#allocation2 + $0x1e8] sm:$0xff] 0.0
      %1369 = vst [vmem:[#allocation2 + $0x1f0] sm:$0xff] 0.0
      %1370 = vst [vmem:[#allocation2 + $0x1f8] sm:$0xff] 0.0
      %v1371 = vlaneseq
      %vm1372 = vcmp.ge.s32.totalorder %v1371, 0
      %vm1373 = vcmp.lt.s32.totalorder %v1371, 512
      %vm1374 = vmand %vm1372, %vm1373
      %s1375 = scalar_lea.vmem [#allocation2], 420
      %1376 = vst.msk [vmem:[%s1375] ss:$8 sm:$0xf] %vm1374, 1.0
      %1377 = vst.msk [vmem:[%s1375] ss:$8 sm:$0x0] %vm1374, 1.0
      %v1378 = vld [vmem:[%s2] sm:$0xf]
      %v1379 = vld [vmem:[#allocation2] sm:$0xff]
      %v1380 = vld [vmem:[#allocation2 + $0x8] sm:$0xff]
      %v1381 = vld [vmem:[#allocation2 + $0x10] sm:$0xff]
      %v1382 = vld [vmem:[#allocation2 + $0x18] sm:$0xff]
      %v1383 = vld [vmem:[#allocation2 + $0x20] sm:$0xff]
      %v1384 = vld [vmem:[#allocation2 + $0x28] sm:$0xff]
      %v1385 = vld [vmem:[#allocation2 + $0x30] sm:$0xff]
      %v1386 = vld [vmem:[#allocation2 + $0x38] sm:$0xff]
      %v1387 = vld [vmem:[#allocation2 + $0x40] sm:$0xff]
      %v1388 = vld [vmem:[#allocation2 + $0x48] sm:$0xff]
      %v1389 = vld [vmem:[#allocation2 + $0x50] sm:$0xff]
      %v1390 = vld [vmem:[#allocation2 + $0x58] sm:$0xff]
      %v1391 = vld [vmem:[#allocation2 + $0x60] sm:$0xff]
      %v1392 = vld [vmem:[#allocation2 + $0x68] sm:$0xff]
      %v1393 = vld [vmem:[#allocation2 + $0x70] sm:$0xff]
      %v1394 = vld [vmem:[#allocation2 + $0x78] sm:$0xff]
      %v1395 = vld [vmem:[#allocation2 + $0x80] sm:$0xff]
      %v1396 = vld [vmem:[#allocation2 + $0x88] sm:$0xff]
      %v1397 = vld [vmem:[#allocation2 + $0x90] sm:$0xff]
      %v1398 = vld [vmem:[#allocation2 + $0x98] sm:$0xff]
      %v1399 = vld [vmem:[#allocation2 + $0xa0] sm:$0xff]
      %v1400 = vld [vmem:[#allocation2 + $0xa8] sm:$0xff]
      %v1401 = vld [vmem:[#allocation2 + $0xb0] sm:$0xff]
      %v1402 = vld [vmem:[#allocation2 + $0xb8] sm:$0xff]
      %v1403 = vld [vmem:[#allocation2 + $0xc0] sm:$0xff]
      %v1404 = vld [vmem:[#allocation2 + $0xc8] sm:$0xff]
      %v1405 = vld [vmem:[#allocation2 + $0xd0] sm:$0xff]
      %v1406 = vld [vmem:[#allocation2 + $0xd8] sm:$0xff]
      %v1407 = vld [vmem:[#allocation2 + $0xe0] sm:$0xff]
      %v1408 = vld [vmem:[#allocation2 + $0xe8] sm:$0xff]
      %v1409 = vld [vmem:[#allocation2 + $0xf0] sm:$0xff]
      %v1410 = vld [vmem:[#allocation2 + $0xf8] sm:$0xff]
      %v1411 = vld [vmem:[#allocation2 + $0x100] sm:$0xff]
      %v1412 = vld [vmem:[#allocation2 + $0x108] sm:$0xff]
      %v1413 = vld [vmem:[#allocation2 + $0x110] sm:$0xff]
      %v1414 = vld [vmem:[#allocation2 + $0x118] sm:$0xff]
      %v1415 = vld [vmem:[#allocation2 + $0x120] sm:$0xff]
      %v1416 = vld [vmem:[#allocation2 + $0x128] sm:$0xff]
      %v1417 = vld [vmem:[#allocation2 + $0x130] sm:$0xff]
      %v1418 = vld [vmem:[#allocation2 + $0x138] sm:$0xff]
      %v1419 = vld [vmem:[#allocation2 + $0x140] sm:$0xff]
      %v1420 = vld [vmem:[#allocation2 + $0x148] sm:$0xff]
      %v1421 = vld [vmem:[#allocation2 + $0x150] sm:$0xff]
      %v1422 = vld [vmem:[#allocation2 + $0x158] sm:$0xff]
      %v1423 = vld [vmem:[#allocation2 + $0x160] sm:$0xff]
      %v1424 = vld [vmem:[#allocation2 + $0x168] sm:$0xff]
      %v1425 = vld [vmem:[#allocation2 + $0x170] sm:$0xff]
      %v1426 = vld [vmem:[#allocation2 + $0x178] sm:$0xff]
      %v1427 = vld [vmem:[#allocation2 + $0x180] sm:$0xff]
      %v1428 = vld [vmem:[#allocation2 + $0x188] sm:$0xff]
      %v1429 = vld [vmem:[#allocation2 + $0x190] sm:$0xff]
      %v1430 = vld [vmem:[#allocation2 + $0x198] sm:$0xff]
      %v1431 = vld [vmem:[#allocation2 + $0x1a0] sm:$0xff]
      %v1432 = vld [vmem:[#allocation2 + $0x1a8] sm:$0xff]
      %v1433 = vld [vmem:[#allocation2 + $0x1b0] sm:$0xff]
      %v1434 = vld [vmem:[#allocation2 + $0x1b8] sm:$0xff]
      %v1435 = vld [vmem:[#allocation2 + $0x1c0] sm:$0xff]
      %v1436 = vld [vmem:[#allocation2 + $0x1c8] sm:$0xff]
      %v1437 = vld [vmem:[#allocation2 + $0x1d0] sm:$0xff]
      %v1438 = vld [vmem:[#allocation2 + $0x1d8] sm:$0xff]
      %v1439 = vld [vmem:[#allocation2 + $0x1e0] sm:$0xff]
      %v1440 = vld [vmem:[#allocation2 + $0x1e8] sm:$0xff]
      %v1441 = vld [vmem:[#allocation2 + $0x1f0] sm:$0xff]
      %v1442 = vld [vmem:[#allocation2 + $0x1f8] sm:$0xff]
      %1443 = vmatprep.subr.mxu0 %v1380
      %1444 = vmatpush1.msra.mxu0 %v1379
      %1445 = vmatprep.subr.mxu0 %v1384
      %1446 = vmatpush1.msra.mxu0 %v1383
      %1447 = vmatprep.subr.mxu0 %v1388
      %1448 = vmatpush1.msra.mxu0 %v1387
      %1449 = vmatprep.subr.mxu0 %v1392
      %1450 = vmatpush1.msra.mxu0 %v1391
      %1451 = vmatprep.subr.mxu0 %v1396
      %1452 = vmatpush1.msra.mxu0 %v1395
      %1453 = vmatprep.subr.mxu0 %v1400
      %1454 = vmatpush1.msra.mxu0 %v1399
      %1455 = vmatprep.subr.mxu0 %v1404
      %1456 = vmatpush1.msra.mxu0 %v1403
      %1457 = vmatprep.subr.mxu0 %v1408
      %1458 = vmatpush1.msra.mxu0 %v1407
      %1459 = vmatprep.subr.mxu0 %v1412
      %1460 = vmatpush1.msra.mxu0 %v1411
      %1461 = vmatprep.subr.mxu0 %v1416
      %1462 = vmatpush1.msra.mxu0 %v1415
      %1463 = vmatprep.subr.mxu0 %v1420
      %1464 = vmatpush1.msra.mxu0 %v1419
      %1465 = vmatprep.subr.mxu0 %v1424
      %1466 = vmatpush1.msra.mxu0 %v1423
      %1467 = vmatprep.subr.mxu0 %v1428
      %1468 = vmatpush1.msra.mxu0 %v1427
      %1469 = vmatprep.subr.mxu0 %v1432
      %1470 = vmatpush1.msra.mxu0 %v1431
      %1471 = vmatprep.subr.mxu0 %v1436
      %1472 = vmatpush1.msra.mxu0 %v1435
      %1473 = vmatprep.subr.mxu0 %v1440
      %1474 = vmatpush1.msra.mxu0 %v1439
      %1475 = vmatprep.subr.mxu0 0.0
      %1476 = vmatpush1.msra.mxu0 0.0
      %1477 = vmatprep.subr.mxu0 0.0
      %1478 = vmatpush1.msra.mxu0 0.0
      %1479 = vmatprep.subr.mxu0 0.0
      %1480 = vmatpush1.msra.mxu0 0.0
      %1481 = vmatprep.subr.mxu0 0.0
      %1482 = vmatpush1.msra.mxu0 0.0
      %1483 = vmatprep.subr.mxu0 0.0
      %1484 = vmatpush1.msra.mxu0 0.0
      %1485 = vmatprep.subr.mxu0 0.0
      %1486 = vmatpush1.msra.mxu0 0.0
      %1487 = vmatprep.subr.mxu0 0.0
      %1488 = vmatpush1.msra.mxu0 0.0
      %1489 = vmatprep.subr.mxu0 0.0
      %1490 = vmatpush1.msra.mxu0 0.0
      %1491 = vmatprep.subr.mxu0 0.0
      %1492 = vmatpush1.msra.mxu0 0.0
      %1493 = vmatprep.subr.mxu0 0.0
      %1494 = vmatpush1.msra.mxu0 0.0
      %1495 = vmatprep.subr.mxu0 0.0
      %1496 = vmatpush1.msra.mxu0 0.0
      %1497 = vmatprep.subr.mxu0 0.0
      %1498 = vmatpush1.msra.mxu0 0.0
      %1499 = vmatprep.subr.mxu0 0.0
      %1500 = vmatpush1.msra.mxu0 0.0
      %1501 = vmatprep.subr.mxu0 0.0
      %1502 = vmatpush1.msra.mxu0 0.0
      %1503 = vmatprep.subr.mxu0 0.0
      %1504 = vmatpush1.msra.mxu0 0.0
      %1505 = vmatprep.subr.mxu0 0.0
      %1506 = vmatpush1.msra.mxu0 0.0
      %1507 = vmatprep.mubr.f32.mxu0 0.0
      %1508 = vmatmul.mubr.f32.gmra.mrb[0].mxu0 %v1378
      %v1509 = vpop.f32.mrb[0].mxu0
      %v1510 = vadd.f32 0.0, %v1509
      %v1511 = vpop.f32.mrb[0].mxu0
      %v1512 = vadd.f32 0.0, %v1511
      %1513 = vdwg.mxu0
      %1514 = vmatprep.subr.mxu0 %v1382
      %1515 = vmatpush1.msra.mxu0 %v1381
      %1516 = vmatprep.subr.mxu0 %v1386
      %1517 = vmatpush1.msra.mxu0 %v1385
      %1518 = vmatprep.subr.mxu0 %v1390
      %1519 = vmatpush1.msra.mxu0 %v1389
      %1520 = vmatprep.subr.mxu0 %v1394
      %1521 = vmatpush1.msra.mxu0 %v1393
      %1522 = vmatprep.subr.mxu0 %v1398
      %1523 = vmatpush1.msra.mxu0 %v1397
      %1524 = vmatprep.subr.mxu0 %v1402
      %1525 = vmatpush1.msra.mxu0 %v1401
      %1526 = vmatprep.subr.mxu0 %v1406
      %1527 = vmatpush1.msra.mxu0 %v1405
      %1528 = vmatprep.subr.mxu0 %v1410
      %1529 = vmatpush1.msra.mxu0 %v1409
      %1530 = vmatprep.subr.mxu0 %v1414
      %1531 = vmatpush1.msra.mxu0 %v1413
      %1532 = vmatprep.subr.mxu0 %v1418
      %1533 = vmatpush1.msra.mxu0 %v1417
      %1534 = vmatprep.subr.mxu0 %v1422
      %1535 = vmatpush1.msra.mxu0 %v1421
      %1536 = vmatprep.subr.mxu0 %v1426
      %1537 = vmatpush1.msra.mxu0 %v1425
      %1538 = vmatprep.subr.mxu0 %v1430
      %1539 = vmatpush1.msra.mxu0 %v1429
      %1540 = vmatprep.subr.mxu0 %v1434
      %1541 = vmatpush1.msra.mxu0 %v1433
      %1542 = vmatprep.subr.mxu0 %v1438
      %1543 = vmatpush1.msra.mxu0 %v1437
      %1544 = vmatprep.subr.mxu0 %v1442
      %1545 = vmatpush1.msra.mxu0 %v1441
      %1546 = vmatprep.subr.mxu0 0.0
      %1547 = vmatpush1.msra.mxu0 0.0
      %1548 = vmatprep.subr.mxu0 0.0
      %1549 = vmatpush1.msra.mxu0 0.0
      %1550 = vmatprep.subr.mxu0 0.0
      %1551 = vmatpush1.msra.mxu0 0.0
      %1552 = vmatprep.subr.mxu0 0.0
      %1553 = vmatpush1.msra.mxu0 0.0
      %1554 = vmatprep.subr.mxu0 0.0
      %1555 = vmatpush1.msra.mxu0 0.0
      %1556 = vmatprep.subr.mxu0 0.0
      %1557 = vmatpush1.msra.mxu0 0.0
      %1558 = vmatprep.subr.mxu0 0.0
      %1559 = vmatpush1.msra.mxu0 0.0
      %1560 = vmatprep.subr.mxu0 0.0
      %1561 = vmatpush1.msra.mxu0 0.0
      %1562 = vmatprep.subr.mxu0 0.0
      %1563 = vmatpush1.msra.mxu0 0.0
      %1564 = vmatprep.subr.mxu0 0.0
      %1565 = vmatpush1.msra.mxu0 0.0
      %1566 = vmatprep.subr.mxu0 0.0
      %1567 = vmatpush1.msra.mxu0 0.0
      %1568 = vmatprep.subr.mxu0 0.0
      %1569 = vmatpush1.msra.mxu0 0.0
      %1570 = vmatprep.subr.mxu0 0.0
      %1571 = vmatpush1.msra.mxu0 0.0
      %1572 = vmatprep.subr.mxu0 0.0
      %1573 = vmatpush1.msra.mxu0 0.0
      %1574 = vmatprep.subr.mxu0 0.0
      %1575 = vmatpush1.msra.mxu0 0.0
      %1576 = vmatprep.subr.mxu0 0.0
      %1577 = vmatpush1.msra.mxu0 0.0
      %1578 = vmatprep.mubr.f32.mxu0 0.0
      %1579 = vmatmul.mubr.f32.gmra.mrb[0].mxu0 %v1378
      %v1580 = vpop.f32.mrb[0].mxu0
      %v1581 = vadd.f32 0.0, %v1580
      %v1582 = vpop.f32.mrb[0].mxu0
      %v1583 = vadd.f32 0.0, %v1582
      %1584 = vdwg.mxu0
      %v1585 = vxor.u32 %v1510, 2147483648
      %v1586 = vxor.u32 %v1512, 2147483648
      %v1587 = vxor.u32 %v1581, 2147483648
      %v1588 = vxor.u32 %v1583, 2147483648
      %v1589 = vmul.f32 %v1585, 1.442695
      %v1590 = vpow.pop %v1589
      %v1591 = vmul.f32 %v1586, 1.442695
      %v1592 = vpow.pop %v1591
      %v1593 = vmul.f32 %v1587, 1.442695
      %v1594 = vpow.pop %v1593
      %v1595 = vmul.f32 %v1588, 1.442695
      %v1596 = vpow.pop %v1595
      %v1597 = vadd.f32 %v1590, 1.0
      %v1598 = vadd.f32 %v1592, 1.0
      %v1599 = vadd.f32 %v1594, 1.0
      %v1600 = vadd.f32 %v1596, 1.0
      %v1601 = vrcp.pop %v1597
      %v1602 = vmul.f32 1.0, %v1601
      %v1603 = vrcp.pop %v1598
      %v1604 = vmul.f32 1.0, %v1603
      %v1605 = vrcp.pop %v1599
      %v1606 = vmul.f32 1.0, %v1605
      %v1607 = vrcp.pop %v1600
      %v1608 = vmul.f32 1.0, %v1607
      %v1613 = vcombine.low %v1602, %v1604
      %v1614 = vcombine.low %v1606, %v1608
      %1617 = vst [vmem:[%s170] sm:$0xff] %v1613
      %1618 = vst [vmem:[%s170 + $0x8] sm:$0xff] %v1614
      %p1619 = scmp.lt.s32.totalorder %s14, 1
      %s1620 = scalar_select %p1619, %s14, 1
      %s1621 = smul.addr %s1620, 4
      %s1622 = smul.addr %s1621, 4
      %s1623 = scalar_lea.vmem %s3, %s1622
      // Predicated region
      $region33: #{query_attention_module.1} parent=31 // pred_check
        %p1624 = pneg %p100
      $region34: #{query_attention_module.1} parent=31 // pred_check_branch
        %1626 = sbr.rel (%p1624) target = $region36
      $region35: #{query_attention_module.1} parent=31 // pred_region
        _
      $region36: #{query_attention_module.1} parent=31 // pred_fallthru
        _
    $region32: #{query_attention_module.1} parent=5 // pred_fallthru
      _
    %p1627 = scmp.le.s32.totalorder 2, %s9
    // Predicated region
    $region37: #{query_attention_module.1} parent=5 // pred_check
      %p1628 = pneg %p1627
    $region38: #{query_attention_module.1} parent=5 // pred_check_branch
      %1630 = sbr.rel (%p1628) target = $region40
    $region39: #{query_attention_module.1} parent=5 // pred_region
      %s1631 = ssub.s32 %s9, 2
      // Predicated region
      $region41: #{query_attention_module.1} parent=39 // pred_check
        %p1632 = pneg %p106
      $region42: #{query_attention_module.1} parent=39 // pred_check_branch
        %1634 = sbr.rel (%p1632) target = $region44
      $region43: #{query_attention_module.1} parent=39 // pred_region
        %p1635 = scmp.lt.s32.totalorder %s15, 1
        %s1636 = scalar_select %p1635, %s15, 1
        %s1637 = smul.addr %s1636, 4
        %s1638 = smul.addr %s1637, 4
        %s1639 = scalar_lea.vmem %s3, %s1638
      $region44: #{query_attention_module.1} parent=39 // pred_fallthru
        _
    $region40: #{query_attention_module.1} parent=5 // pred_fallthru
      _
  $region6: #{query_attention_module.1} parent=0 // loop_footer
    %s13 = sadd.s32 1, %s9
  $region7: #{query_attention_module.1} parent=0 // loop_footer_branch
    %8 = sbr.rel target = $region3
  $region8: #{query_attention_module.1} parent=0 // loop_exit
    _

</llo_original>
